<compile_context>
chip_gen: v7x
topology: tpu7x:2x2x1
jax: 0.10.0
libtpu: 0.0.40
codegen_flags: <defaults>
</compile_context>

<pallas_src>
import jax
import jax.numpy as jnp
from jax.experimental import pallas as pl
from jax.experimental.pallas import tpu as pltpu


def _cosine_sim_kernel(xr_ref, xc_ref, ir_ref, ic_ref, s_ref):
    # xr_ref: (TM, D) bf16 row block, xc_ref: (TN, D) bf16 column block,
    # ir_ref: (TM, 1) f32 inverse row norms, ic_ref: (1, TN) f32 inverse column norms,
    # s_ref:  (TM, TN) output tile.
    # Gram tile on the MXU: contract on D for BOTH operands (no explicit transpose),
    # bf16 inputs with f32 accumulation.
    gram = jax.lax.dot_general(
        xr_ref[...], xc_ref[...],
        dimension_numbers=(((1,), (1,)), ((), ())),
        preferred_element_type=jnp.float32,
    )  # (TM, TN) f32
    # Cheap epilogue: two broadcast multiplies with precomputed inverse norms.
    s_ref[...] = (gram * ir_ref[...] * ic_ref[...]).astype(s_ref.dtype)


def _pick_tiles(n: int) -> tuple[int, int]:
    """Row-biased tiles; keep >=2 row tiles whenever N allows (feeds both v7x TCs)."""
    tm = 128
    for cand in (1024, 512, 256, 128):
        if n > cand:          # at least 2 row tiles after padding
            tm = cand
            break
    tn = min(tm, 512)
    return tm, tn


def text_similarity(embeds: jax.Array, *, out_dtype=jnp.float32):
    """Mirrors TextSimilarity.forward given precomputed embeddings.

    embeds: (N, D) float array of text-unit embeddings.
    Returns (S, embeds) with S of shape (N, N) in `out_dtype`.
    """
    n, d = embeds.shape
    tm, tn = _pick_tiles(n)

    # bf16 inputs halve HBM->VMEM DMA bytes; accumulation stays f32 on the MXU.
    x = embeds.astype(jnp.bfloat16)

    # Inverse norms computed once in f32 from the same bf16-quantized values the MXU sees.
    # (Zero-norm rows -> inf -> NaN similarities, matching PyTorch's 0/0 behavior; padded
    #  rows fall in the sliced-off region.)
    x32 = x.astype(jnp.float32)
    inv_norm = jax.lax.rsqrt(jnp.sum(x32 * x32, axis=-1, keepdims=True))  # (N, 1) f32

    # Pad N up to a multiple of the (power-of-two) row tile; tn divides tm so one pad works.
    n_pad = ((n + tm - 1) // tm) * tm
    if n_pad != n:
        x = jnp.pad(x, ((0, n_pad - n), (0, 0)))
        inv_norm = jnp.pad(inv_norm, ((0, n_pad - n), (0, 0)))
    inv_r = inv_norm                 # (N_pad, 1)
    inv_c = inv_norm.T               # (1, N_pad)

    grid_m, grid_n = n_pad // tm, n_pad // tn
    out_bytes = n_pad * n_pad * jnp.dtype(out_dtype).itemsize
    cost = pl.CostEstimate(
        flops=2 * n_pad * n_pad * d,
        transcendentals=0,
        # row blocks once per row strip + column blocks re-read per row strip + output.
        bytes_accessed=n_pad * d * 2 * (1 + grid_m) + out_bytes + 8 * n_pad,
    )

    s = pl.pallas_call(
        _cosine_sim_kernel,
        out_shape=jax.ShapeDtypeStruct((n_pad, n_pad), out_dtype),
        grid_spec=pltpu.PrefetchScalarGridSpec(
            num_scalar_prefetch=0,
            grid=(grid_m, grid_n),
            in_specs=[
                pl.BlockSpec((tm, d), lambda i, j: (i, 0)),   # row block of embeddings
                pl.BlockSpec((tn, d), lambda i, j: (j, 0)),   # column block of embeddings
                pl.BlockSpec((tm, 1), lambda i, j: (i, 0)),   # inverse row norms
                pl.BlockSpec((1, tn), lambda i, j: (0, j)),   # inverse column norms
            ],
            out_specs=pl.BlockSpec((tm, tn), lambda i, j: (i, j)),
        ),
        compiler_params=pltpu.CompilerParams(
            # Both tile axes are independent -> shard across v7x's two TensorCores.
            dimension_semantics=("parallel", "parallel"),
        ),
        cost_estimate=cost,
    )(x, x, inv_r, inv_c)

    if n_pad != n:
        s = s[:n, :n]
    return s, embeds


def _reference(embeds: jax.Array) -> jax.Array:
    # Match the kernel's bf16 quantization of the inputs; all math in f32.
    x = embeds.astype(jnp.bfloat16).astype(jnp.float32)
    gram = jnp.dot(x, x.T, precision=jax.lax.Precision.HIGHEST)
    norm = jnp.linalg.norm(x, axis=-1, keepdims=True)  # (N, 1)
    return gram / (norm * norm.T)


if __name__ == "__main__":
    key = jax.random.PRNGKey(0)
    # SBERT-like embedding dim 768; 512 text units -> a 2x2 grid of 256-wide tiles.
    N, D = 512, 768
    embeds = jax.random.normal(key, (N, D), dtype=jnp.float32)

    S, emb_out = text_similarity(embeds)
    S = jax.block_until_ready(S)

    S_ref = _reference(embeds)
    assert S.shape == (N, N)
    assert emb_out.shape == (N, D)
    assert jnp.allclose(S, S_ref, atol=1e-4, rtol=1e-4), "mismatch vs reference"
    # Diagonal of a cosine-similarity matrix should be ~1.
    assert jnp.allclose(jnp.diag(S), jnp.ones((N,), jnp.float32), atol=1e-4)

    # Non-multiple-of-tile N exercises the pad-and-slice path.
    N2 = 200
    embeds2 = jax.random.normal(jax.random.PRNGKey(1), (N2, D), dtype=jnp.float32)
    S2, _ = text_similarity(embeds2)
    S2 = jax.block_until_ready(S2)
    assert S2.shape == (N2, N2)
    assert jnp.allclose(S2, _reference(embeds2), atol=1e-4, rtol=1e-4), "ragged mismatch"

    # bf16-output mode (reduced writeback) -- looser tolerance by construction.
    S3, _ = text_similarity(embeds, out_dtype=jnp.bfloat16)
    S3 = jax.block_until_ready(S3)
    assert jnp.allclose(S3.astype(jnp.float32), S_ref, atol=2e-2, rtol=2e-2), "bf16-out mismatch"

    print("KERNEL_OK")
</pallas_src>

<mosaic_0001>
module attributes {stable_mosaic.version = 11 : i64} {
  func.func @_cosine_sim_kernel(%arg0: i32, %arg1: i32, %arg2: memref<256x768xbf16, #tpu.memory_space<vmem>>, %arg3: memref<256x768xbf16, #tpu.memory_space<vmem>>, %arg4: memref<256x1xf32, #tpu.memory_space<vmem>>, %arg5: memref<1x256xf32, #tpu.memory_space<vmem>>, %arg6: memref<256x256xf32, #tpu.memory_space<vmem>>) attributes {dimension_semantics = [#tpu.dimension_semantics<parallel>, #tpu.dimension_semantics<parallel>], iteration_bounds = array<i64: 2, 2>, scalar_prefetch = 0 : i64, scratch_operands = 0 : i64, tpu.core_type = #tpu.core_type<tc>, window_params = [{transform_indices = @transform_0, window_bounds = array<i64: 256, 768>}, {transform_indices = @transform_1, window_bounds = array<i64: 256, 768>}, {transform_indices = @transform_2, window_bounds = array<i64: 256, 1>}, {transform_indices = @transform_3, window_bounds = array<i64: 1, 256>}, {transform_indices = @transform_4, window_bounds = array<i64: 256, 256>}]} {
    %c0 = arith.constant 0 : index
    %c0_0 = arith.constant 0 : index
    %0 = vector.load %arg2[%c0, %c0_0] : memref<256x768xbf16, #tpu.memory_space<vmem>>, vector<256x768xbf16>
    %c0_1 = arith.constant 0 : index
    %c0_2 = arith.constant 0 : index
    %1 = vector.load %arg3[%c0_1, %c0_2] : memref<256x768xbf16, #tpu.memory_space<vmem>>, vector<256x768xbf16>
    %cst = arith.constant dense<0.000000e+00> : vector<256x256xf32>
    %2 = tpu.matmul %0, %1, %cst {dimension_numbers = #tpu.dot_dimension_numbers<[1], [1], [0], [0], [0, 0, 1, 0], [], []>} : vector<256x768xbf16>, vector<256x768xbf16>, vector<256x256xf32> -> vector<256x256xf32>
    %c0_3 = arith.constant 0 : index
    %c0_4 = arith.constant 0 : index
    %3 = vector.load %arg4[%c0_3, %c0_4] : memref<256x1xf32, #tpu.memory_space<vmem>>, vector<256x1xf32>
    %4 = vector.broadcast %3 : vector<256x1xf32> to vector<256x256xf32>
    %5 = arith.mulf %2, %4 : vector<256x256xf32>
    %c0_5 = arith.constant 0 : index
    %c0_6 = arith.constant 0 : index
    %6 = vector.load %arg5[%c0_5, %c0_6] : memref<1x256xf32, #tpu.memory_space<vmem>>, vector<1x256xf32>
    %7 = vector.broadcast %6 : vector<1x256xf32> to vector<256x256xf32>
    %8 = arith.mulf %5, %7 : vector<256x256xf32>
    %c0_7 = arith.constant 0 : index
    %c0_8 = arith.constant 0 : index
    %9 = vector.load %arg6[%c0_7, %c0_8] : memref<256x256xf32, #tpu.memory_space<vmem>>, vector<256x256xf32>
    tpu.vector_store %arg6[%c0_7, %c0_8], %8 {strides = array<i32>} : memref<256x256xf32, #tpu.memory_space<vmem>>, vector<256x256xf32>,
    return
  }
  func.func @transform_0(%arg0: i32, %arg1: i32) -> (i32, i32) {
    %c0_i32 = arith.constant 0 : i32
    %c0_i32_0 = arith.constant 0 : i32
    return %arg0, %c0_i32 : i32, i32
  }
  func.func @transform_1(%arg0: i32, %arg1: i32) -> (i32, i32) {
    %c0_i32 = arith.constant 0 : i32
    %c0_i32_0 = arith.constant 0 : i32
    return %arg1, %c0_i32 : i32, i32
  }
  func.func @transform_2(%arg0: i32, %arg1: i32) -> (i32, i32) {
    %c0_i32 = arith.constant 0 : i32
    %c0_i32_0 = arith.constant 0 : i32
    return %arg0, %c0_i32 : i32, i32
  }
  func.func @transform_3(%arg0: i32, %arg1: i32) -> (i32, i32) {
    %c0_i32 = arith.constant 0 : i32
    %c0_i32_0 = arith.constant 0 : i32
    return %c0_i32, %arg1 : i32, i32
  }
  func.func @transform_4(%arg0: i32, %arg1: i32) -> (i32, i32) {
    %c0_i32 = arith.constant 0 : i32
    return %arg0, %arg1 : i32, i32
  }
}

</mosaic_0001>

<llo_original>
// kernel: tpu_custom_call.1
$region0: #{tpu_custom_call.1}
  #allocation0 [shape = 'u32[]', space=smem, size = 0x4, offset = 0x4, fixed_abs, tag = 'smem constant byte address 0x4 - core index']
  #allocation1 [shape = 'u32[144,128]{1,0:T(1,128)}', space=vmem, size = 0x12000, scoped, tag = 'internal scratch']
  %s0 = inlined_call_operand.hbm [shape: bf16[512,768], index: 0, kind: input, shape index: {}]
  %s1 = inlined_call_operand.hbm [shape: bf16[512,768], index: 1, kind: input, shape index: {}]
  %s2 = inlined_call_operand.vmem [shape: f32[512,1], index: 2, kind: input, shape index: {}]
  %s3 = inlined_call_operand.vmem [shape: f32[1,512], index: 3, kind: input, shape index: {}]
  %s4 = inlined_call_operand.hbm [shape: f32[512,512], index: 4, kind: output, shape index: {}]
  %s5 = sld [smem:[#allocation0]]
  $region57: #{tpu_custom_call.1} parent=0
    _
  %s7 = ssub.s32 1, %s5
  %s8 = scalar_select 0, %s7, %s5
  $region1: #{tpu_custom_call.1} parent=0
    #allocation2 [shape = 'u8[786432]{0}', space=vmem, size = 0xc0000, scoped, tag = 'input window, operand 0']
    #allocation3 [shape = 's32[2]{0}', space=sflag, size = 0x8, scoped, tag = 'scoped memory for tpu_custom_call.1']
    #allocation4 [shape = 's32[2]{0}', space=sflag, size = 0x8, scoped, tag = 'scoped memory for tpu_custom_call.1']
    #allocation5 [shape = 'u8[786432]{0}', space=vmem, size = 0xc0000, scoped, tag = 'input window, operand 1']
    #allocation6 [shape = 's32[2]{0}', space=sflag, size = 0x8, scoped, tag = 'scoped memory for tpu_custom_call.1']
    #allocation7 [shape = 'u8[524288]{0}', space=vmem, size = 0x80000, scoped, tag = 'output window, operand 0']
    %9 = vsyncpa [#allocation3], 0
    %s10 = scalar_lea.sflag [#allocation3], 1
    %11 = vsyncpa %s10, 0
    %12 = vsyncpa [#allocation6], 0
    %s13 = scalar_lea.sflag [#allocation6], 1
    %14 = vsyncpa %s13, 0
    %15 = vsyncpa [#allocation4], 0
    %s16 = scalar_lea.sflag [#allocation4], 1
    %17 = vsyncpa %s16, 0
    loop: start=0, step=1, limit=6
    $region2: #{tpu_custom_call.1} parent=1 // loop_pre_header
      _
    $region3: #{tpu_custom_call.1} parent=1 // loop_header
      %s19 = sphi 0, %s23
      %p20 = scmp.ge.s32.totalorder %s19, 6
      %s26 = sphi 0, %s38
      %s27 = sphi 0, %s34
      %s28 = sphi 0, %s26
      %s29 = sphi 0, %s27
      %s30 = sphi 0, %s28
      %s31 = sphi 0, %s29
      %s41 = sphi 0, %s43
      %s44 = sphi 0, %s41
      %s45 = sphi 0, %s44
      %s61 = sphi 0, %s45
      %s67 = sphi 0, %s69
      %s70 = sphi 0, %s67
      %s71 = sphi 0, %s70
      %s87 = sphi 0, %s71
      %s93 = sphi 0, %s95
      %s96 = sphi 0, %s93
      %s97 = sphi 0, %s96
      %s113 = sphi 0, %s97
      %s119 = sphi 0, %s121
      %s122 = sphi 0, %s119
      %s123 = sphi 0, %s122
      %s139 = sphi 0, %s123
      %s147 = sphi 0, %s149
      %s150 = sphi 0, %s147
      %s151 = sphi 0, %s150
      %s167 = sphi 0, %s151
    $region4: #{tpu_custom_call.1} parent=1 // loop_header_branch
      %22 = sbr.rel (%p20) target = $region8
    $region5: #{tpu_custom_call.1} parent=1 // loop_body
      %s24 = ssub.s32 %s19, 1
      %s25 = ssub.s32 %s19, 2
      %s32 = sadd.s32 1, %s27
      %p33 = scmp.ge.s32.totalorder %s32, 2
      %s34 = scalar_select %p33, 0, %s32
      %s35 = sadd.s32 1, %s26
      %s36 = scalar_select %p33, %s35, %s26
      %p37 = scmp.ge.s32.totalorder %s36, 2
      %s38 = scalar_select %p37, 0, %s36
      %s39 = ssub.s32 %s26, %s38
      %p40 = scmp.eq.s32.totalorder %s39, 0
      %s42 = sadd.s32 %s41, 1
      %s43 = scalar_select %p40, %s41, %s42
      %p46 = pneg %p40
      %p47 = scmp.eq.s32.totalorder %s19, 3
      %p48 = por %p46, %p47
      %p49 = scmp.ne.s32.totalorder %s41, %s44
      %p50 = scmp.eq.s32.totalorder %s19, 0
      %p51 = por %p49, %p50
      %p52 = scmp.ne.s32.totalorder %s41, %s44
      %p53 = scmp.eq.s32.totalorder %s24, 3
      %p54 = por %p52, %p53
      %p55 = scmp.ne.s32.totalorder %s44, %s45
      %p56 = scmp.eq.s32.totalorder %s24, 0
      %p57 = por %p55, %p56
      %p58 = scmp.ne.s32.totalorder %s44, %s45
      %p59 = scmp.eq.s32.totalorder %s25, 3
      %p60 = por %p58, %p59
      %p62 = scmp.ne.s32.totalorder %s45, %s61
      %p63 = scmp.eq.s32.totalorder %s25, 0
      %p64 = por %p62, %p63
      %s65 = ssub.s32 %s27, %s34
      %p66 = scmp.eq.s32.totalorder %s65, 0
      %s68 = sadd.s32 %s67, 1
      %s69 = scalar_select %p66, %s67, %s68
      %p72 = pneg %p66
      %p73 = scmp.eq.s32.totalorder %s19, 3
      %p74 = por %p72, %p73
      %p75 = scmp.ne.s32.totalorder %s67, %s70
      %p76 = scmp.eq.s32.totalorder %s19, 0
      %p77 = por %p75, %p76
      %p78 = scmp.ne.s32.totalorder %s67, %s70
      %p79 = scmp.eq.s32.totalorder %s24, 3
      %p80 = por %p78, %p79
      %p81 = scmp.ne.s32.totalorder %s70, %s71
      %p82 = scmp.eq.s32.totalorder %s24, 0
      %p83 = por %p81, %p82
      %p84 = scmp.ne.s32.totalorder %s70, %s71
      %p85 = scmp.eq.s32.totalorder %s25, 3
      %p86 = por %p84, %p85
      %p88 = scmp.ne.s32.totalorder %s71, %s87
      %p89 = scmp.eq.s32.totalorder %s25, 0
      %p90 = por %p88, %p89
      %s91 = ssub.s32 %s26, %s38
      %p92 = scmp.eq.s32.totalorder %s91, 0
      %s94 = sadd.s32 %s93, 1
      %s95 = scalar_select %p92, %s93, %s94
      %p98 = pneg %p92
      %p99 = scmp.eq.s32.totalorder %s19, 3
      %p100 = por %p98, %p99
      %p101 = scmp.ne.s32.totalorder %s93, %s96
      %p102 = scmp.eq.s32.totalorder %s19, 0
      %p103 = por %p101, %p102
      %p104 = scmp.ne.s32.totalorder %s93, %s96
      %p105 = scmp.eq.s32.totalorder %s24, 3
      %p106 = por %p104, %p105
      %p107 = scmp.ne.s32.totalorder %s96, %s97
      %p108 = scmp.eq.s32.totalorder %s24, 0
      %p109 = por %p107, %p108
      %p110 = scmp.ne.s32.totalorder %s96, %s97
      %p111 = scmp.eq.s32.totalorder %s25, 3
      %p112 = por %p110, %p111
      %p114 = scmp.ne.s32.totalorder %s97, %s113
      %p115 = scmp.eq.s32.totalorder %s25, 0
      %p116 = por %p114, %p115
      %s117 = ssub.s32 %s27, %s34
      %p118 = scmp.eq.s32.totalorder %s117, 0
      %s120 = sadd.s32 %s119, 1
      %s121 = scalar_select %p118, %s119, %s120
      %p124 = pneg %p118
      %p125 = scmp.eq.s32.totalorder %s19, 3
      %p126 = por %p124, %p125
      %p127 = scmp.ne.s32.totalorder %s119, %s122
      %p128 = scmp.eq.s32.totalorder %s19, 0
      %p129 = por %p127, %p128
      %p130 = scmp.ne.s32.totalorder %s119, %s122
      %p131 = scmp.eq.s32.totalorder %s24, 3
      %p132 = por %p130, %p131
      %p133 = scmp.ne.s32.totalorder %s122, %s123
      %p134 = scmp.eq.s32.totalorder %s24, 0
      %p135 = por %p133, %p134
      %p136 = scmp.ne.s32.totalorder %s122, %s123
      %p137 = scmp.eq.s32.totalorder %s25, 3
      %p138 = por %p136, %p137
      %p140 = scmp.ne.s32.totalorder %s123, %s139
      %p141 = scmp.eq.s32.totalorder %s25, 0
      %p142 = por %p140, %p141
      %s143 = ssub.s32 %s26, %s38
      %s144 = ssub.s32 %s27, %s34
      %s145 = sor.u32 %s143, %s144
      %p146 = scmp.eq.s32.totalorder %s145, 0
      %s148 = sadd.s32 %s147, 1
      %s149 = scalar_select %p146, %s147, %s148
      %p152 = pneg %p146
      %p153 = scmp.eq.s32.totalorder %s19, 3
      %p154 = por %p152, %p153
      %p155 = scmp.ne.s32.totalorder %s147, %s150
      %p156 = scmp.eq.s32.totalorder %s19, 0
      %p157 = por %p155, %p156
      %p158 = scmp.ne.s32.totalorder %s147, %s150
      %p159 = scmp.eq.s32.totalorder %s24, 3
      %p160 = por %p158, %p159
      %p161 = scmp.ne.s32.totalorder %s150, %s151
      %p162 = scmp.eq.s32.totalorder %s24, 0
      %p163 = por %p161, %p162
      %p164 = scmp.ne.s32.totalorder %s150, %s151
      %p165 = scmp.eq.s32.totalorder %s25, 3
      %p166 = por %p164, %p165
      %p168 = scmp.ne.s32.totalorder %s151, %s167
      %p169 = scmp.eq.s32.totalorder %s25, 0
      %p170 = por %p168, %p169
      %p171 = scmp.le.s32.totalorder 1, %s19
      %p172 = scmp.lt.s32.totalorder %s19, 5
      %p173 = pnand %p171, %p172
      %p174 = pneg %p173
      // Predicated region
      $region9: #{tpu_custom_call.1} parent=5 // pred_check
        _
      $region10: #{tpu_custom_call.1} parent=5 // pred_check_branch
        %176 = sbr.rel (%p173) target = $region12
      $region11: #{tpu_custom_call.1} parent=5 // pred_region
        %s177 = ssub.s32 %s19, 1
      $region12: #{tpu_custom_call.1} parent=5 // pred_fallthru
        _
      %p178 = scmp.lt.s32.totalorder %s19, 4
      // Predicated region
      $region13: #{tpu_custom_call.1} parent=5 // pred_check
        %p179 = pneg %p178
      $region14: #{tpu_custom_call.1} parent=5 // pred_check_branch
        %181 = sbr.rel (%p179) target = $region16
      $region15: #{tpu_custom_call.1} parent=5 // pred_region
        // Predicated region
        $region17: #{tpu_custom_call.1} parent=15 // pred_check
          %p182 = pneg %p51
        $region18: #{tpu_custom_call.1} parent=15 // pred_check_branch
          %184 = sbr.rel (%p182) target = $region20
        $region19: #{tpu_custom_call.1} parent=15 // pred_region
          %s185 = sand.u32 %s41, 1
          %s186 = scalar_lea.sflag [#allocation3], %s185
          %s187 = sand.u32 %s41, 1
          %s188 = smul.addr %s187, 768
          %s189 = scalar_lea.vmem [#allocation2], %s188
          %s190 = smul.u32 32, %s26
          %s192 = ssub.s32 12288, 12288
          %193 = vsyncadd %s186, %s192
          %s194 = smul.addr %s190, 6
          %s195 = smul.addr %s194, 64
          %s196 = scalar_lea.hbm %s0, %s195
          %s197 = sshll.u32 %s189, 4
          %s198 = int_to_ptr.vmem [resolvable:$true] %s197
          %203 = dma.hbm_to_vmem [thread:$0]  %s196, 12288, %s198, %s186, 384, 384, 24
        $region20: #{tpu_custom_call.1} parent=15 // pred_fallthru
          _
        // Predicated region
        $region21: #{tpu_custom_call.1} parent=15 // pred_check
          %p204 = pneg %p77
        $region22: #{tpu_custom_call.1} parent=15 // pred_check_branch
          %206 = sbr.rel (%p204) target = $region24
        $region23: #{tpu_custom_call.1} parent=15 // pred_region
          %s207 = sand.u32 %s67, 1
          %s208 = scalar_lea.sflag [#allocation6], %s207
          %s209 = sand.u32 %s67, 1
          %s210 = smul.addr %s209, 768
          %s211 = scalar_lea.vmem [#allocation5], %s210
          %s212 = smul.u32 32, %s27
          %s214 = ssub.s32 12288, 12288
          %215 = vsyncadd %s208, %s214
          %s216 = smul.addr %s212, 6
          %s217 = smul.addr %s216, 64
          %s218 = scalar_lea.hbm %s1, %s217
          %s219 = sshll.u32 %s211, 4
          %s220 = int_to_ptr.vmem [resolvable:$true] %s219
          %225 = dma.hbm_to_vmem [thread:$0]  %s218, 12288, %s220, %s208, 384, 384, 24
        $region24: #{tpu_custom_call.1} parent=15 // pred_fallthru
          _
        // Predicated region
        $region25: #{tpu_custom_call.1} parent=15 // pred_check
          %p226 = pneg %p103
        $region26: #{tpu_custom_call.1} parent=15 // pred_check_branch
          %228 = sbr.rel (%p226) target = $region28
        $region27: #{tpu_custom_call.1} parent=15 // pred_region
          %s229 = smul.u32 32, %s26
          %p230 = scmp.lt.s32.totalorder %s229, 63
          %s231 = scalar_select %p230, %s229, 63
          %s232 = smul.addr %s231, 8
          %s233 = scalar_lea.vmem %s2, %s232
          %s234 = smul.u32 32, %s26
        $region28: #{tpu_custom_call.1} parent=15 // pred_fallthru
          _
        // Predicated region
        $region29: #{tpu_custom_call.1} parent=15 // pred_check
          %p235 = pneg %p129
        $region30: #{tpu_custom_call.1} parent=15 // pred_check_branch
          %237 = sbr.rel (%p235) target = $region32
        $region31: #{tpu_custom_call.1} parent=15 // pred_region
          %s238 = smul.u32 2, %s27
          %p239 = scmp.lt.s32.totalorder %s238, 3
          %s240 = scalar_select %p239, %s238, 3
          %s241 = scalar_lea.vmem %s3, %s240
          %s242 = smul.u32 2, %s27
        $region32: #{tpu_custom_call.1} parent=15 // pred_fallthru
          _
      $region16: #{tpu_custom_call.1} parent=5 // pred_fallthru
        _
      %p243 = scmp.le.s32.totalorder 1, %s19
      %p244 = scmp.lt.s32.totalorder %s19, 5
      %p245 = pnand %p243, %p244
      %p246 = pneg %p245
      // Predicated region
      $region33: #{tpu_custom_call.1} parent=5 // pred_check
        _
      $region34: #{tpu_custom_call.1} parent=5 // pred_check_branch
        %248 = sbr.rel (%p245) target = $region36
      $region35: #{tpu_custom_call.1} parent=5 // pred_region
        %s249 = ssub.s32 %s19, 1
        %s250 = sand.u32 %s44, 1
        %s251 = scalar_lea.sflag [#allocation3], %s250
        %s252 = sand.u32 %s44, 1
        %s253 = smul.addr %s252, 768
        %s254 = scalar_lea.vmem [#allocation2], %s253
        // Predicated region
        $region37: #{tpu_custom_call.1} parent=35 // pred_check
          %p255 = pneg %p57
        $region38: #{tpu_custom_call.1} parent=35 // pred_check_branch
          %257 = sbr.rel (%p255) target = $region40
        $region39: #{tpu_custom_call.1} parent=35 // pred_region
          %258 = dma.done %s251, 12288
        $region40: #{tpu_custom_call.1} parent=35 // pred_fallthru
          _
        %s259 = sand.u32 %s70, 1
        %s260 = scalar_lea.sflag [#allocation6], %s259
        %s261 = sand.u32 %s70, 1
        %s262 = smul.addr %s261, 768
        %s263 = scalar_lea.vmem [#allocation5], %s262
        // Predicated region
        $region41: #{tpu_custom_call.1} parent=35 // pred_check
          %p264 = pneg %p83
        $region42: #{tpu_custom_call.1} parent=35 // pred_check_branch
          %266 = sbr.rel (%p264) target = $region44
        $region43: #{tpu_custom_call.1} parent=35 // pred_region
          %267 = dma.done %s260, 12288
        $region44: #{tpu_custom_call.1} parent=35 // pred_fallthru
          _
        %s268 = sand.u32 %s44, 1
        %s269 = scalar_lea.sflag [#allocation3], %s268
        %s270 = sand.u32 %s44, 1
        %s271 = smul.addr %s270, 768
        %s272 = scalar_lea.vmem [#allocation2], %s271
        %p273 = pneg %p57
        %p274 = pneg %p54
        %s275 = sand.u32 %s70, 1
        %s276 = scalar_lea.sflag [#allocation6], %s275
        %s277 = sand.u32 %s70, 1
        %s278 = smul.addr %s277, 768
        %s279 = scalar_lea.vmem [#allocation5], %s278
        %p280 = pneg %p83
        %p281 = pneg %p80
        %s282 = smul.u32 32, %s28
        %p283 = scmp.lt.s32.totalorder %s282, 63
        %s284 = scalar_select %p283, %s282, 63
        %s285 = smul.addr %s284, 8
        %s286 = scalar_lea.vmem %s2, %s285
        %p287 = pneg %p109
        %p288 = pneg %p106
        %s289 = smul.u32 2, %s29
        %p290 = scmp.lt.s32.totalorder %s289, 3
        %s291 = scalar_select %p290, %s289, 3
        %s292 = scalar_lea.vmem %s3, %s291
        %p293 = pneg %p135
        %p294 = pneg %p132
        %p295 = pneg %p163
        %p296 = pneg %p160
        %s297 = sand.u32 %s150, 1
        %s298 = scalar_lea.sflag [#allocation4], %s297
        %s299 = sand.u32 %s150, 1
        %s300 = smul.addr %s299, 512
        %s301 = scalar_lea.vmem [#allocation7], %s300
        %s302 = smul.u32 32, %s28
        %s303 = smul.u32 32, %s29
        %s304 = smul.u32 32, %s28
        %p305 = scmp.lt.s32.totalorder %s304, 63
        %s306 = scalar_select %p305, %s304, 63
        %s307 = smul.addr %s306, 8
        %s308 = scalar_lea.vmem %s2, %s307
        %s309 = smul.u32 32, %s28
        %s310 = smul.u32 2, %s29
        %p311 = scmp.lt.s32.totalorder %s310, 3
        %s312 = scalar_select %p311, %s310, 3
        %s313 = scalar_lea.vmem %s3, %s312
        %s314 = smul.u32 2, %s29
        %s315 = smul.u32 32, %s28
        %s316 = smul.u32 2, %s29
        %v317 = vld [vmem:[%s254] sm:$0xff]
        %v318 = vld [vmem:[%s254 + $0x8] sm:$0xff]
        %v319 = vld [vmem:[%s254 + $0x10] sm:$0xff]
        %v320 = vld [vmem:[%s254 + $0x18] sm:$0xff]
        %v321 = vld [vmem:[%s254 + $0x20] sm:$0xff]
        %v322 = vld [vmem:[%s254 + $0x28] sm:$0xff]
        %v323 = vld [vmem:[%s254 + $0x30] sm:$0xff]
        %v324 = vld [vmem:[%s254 + $0x38] sm:$0xff]
        %v325 = vld [vmem:[%s254 + $0x40] sm:$0xff]
        %v326 = vld [vmem:[%s254 + $0x48] sm:$0xff]
        %v327 = vld [vmem:[%s254 + $0x50] sm:$0xff]
        %v328 = vld [vmem:[%s254 + $0x58] sm:$0xff]
        %v329 = vld [vmem:[%s254 + $0x60] sm:$0xff]
        %v330 = vld [vmem:[%s254 + $0x68] sm:$0xff]
        %v331 = vld [vmem:[%s254 + $0x70] sm:$0xff]
        %v332 = vld [vmem:[%s254 + $0x78] sm:$0xff]
        %v333 = vld [vmem:[%s254 + $0x80] sm:$0xff]
        %v334 = vld [vmem:[%s254 + $0x88] sm:$0xff]
        %v335 = vld [vmem:[%s254 + $0x90] sm:$0xff]
        %v336 = vld [vmem:[%s254 + $0x98] sm:$0xff]
        %v337 = vld [vmem:[%s254 + $0xa0] sm:$0xff]
        %v338 = vld [vmem:[%s254 + $0xa8] sm:$0xff]
        %v339 = vld [vmem:[%s254 + $0xb0] sm:$0xff]
        %v340 = vld [vmem:[%s254 + $0xb8] sm:$0xff]
        %v341 = vld [vmem:[%s254 + $0xc0] sm:$0xff]
        %v342 = vld [vmem:[%s254 + $0xc8] sm:$0xff]
        %v343 = vld [vmem:[%s254 + $0xd0] sm:$0xff]
        %v344 = vld [vmem:[%s254 + $0xd8] sm:$0xff]
        %v345 = vld [vmem:[%s254 + $0xe0] sm:$0xff]
        %v346 = vld [vmem:[%s254 + $0xe8] sm:$0xff]
        %v347 = vld [vmem:[%s254 + $0xf0] sm:$0xff]
        %v348 = vld [vmem:[%s254 + $0xf8] sm:$0xff]
        %v349 = vld [vmem:[%s254 + $0x100] sm:$0xff]
        %v350 = vld [vmem:[%s254 + $0x108] sm:$0xff]
        %v351 = vld [vmem:[%s254 + $0x110] sm:$0xff]
        %v352 = vld [vmem:[%s254 + $0x118] sm:$0xff]
        %v353 = vld [vmem:[%s254 + $0x120] sm:$0xff]
        %v354 = vld [vmem:[%s254 + $0x128] sm:$0xff]
        %v355 = vld [vmem:[%s254 + $0x130] sm:$0xff]
        %v356 = vld [vmem:[%s254 + $0x138] sm:$0xff]
        %v357 = vld [vmem:[%s254 + $0x140] sm:$0xff]
        %v358 = vld [vmem:[%s254 + $0x148] sm:$0xff]
        %v359 = vld [vmem:[%s254 + $0x150] sm:$0xff]
        %v360 = vld [vmem:[%s254 + $0x158] sm:$0xff]
        %v361 = vld [vmem:[%s254 + $0x160] sm:$0xff]
        %v362 = vld [vmem:[%s254 + $0x168] sm:$0xff]
        %v363 = vld [vmem:[%s254 + $0x170] sm:$0xff]
        %v364 = vld [vmem:[%s254 + $0x178] sm:$0xff]
        %v365 = vld [vmem:[%s254 + $0x180] sm:$0xff]
        %v366 = vld [vmem:[%s254 + $0x188] sm:$0xff]
        %v367 = vld [vmem:[%s254 + $0x190] sm:$0xff]
        %v368 = vld [vmem:[%s254 + $0x198] sm:$0xff]
        %v369 = vld [vmem:[%s254 + $0x1a0] sm:$0xff]
        %v370 = vld [vmem:[%s254 + $0x1a8] sm:$0xff]
        %v371 = vld [vmem:[%s254 + $0x1b0] sm:$0xff]
        %v372 = vld [vmem:[%s254 + $0x1b8] sm:$0xff]
        %v373 = vld [vmem:[%s254 + $0x1c0] sm:$0xff]
        %v374 = vld [vmem:[%s254 + $0x1c8] sm:$0xff]
        %v375 = vld [vmem:[%s254 + $0x1d0] sm:$0xff]
        %v376 = vld [vmem:[%s254 + $0x1d8] sm:$0xff]
        %v377 = vld [vmem:[%s254 + $0x1e0] sm:$0xff]
        %v378 = vld [vmem:[%s254 + $0x1e8] sm:$0xff]
        %v379 = vld [vmem:[%s254 + $0x1f0] sm:$0xff]
        %v380 = vld [vmem:[%s254 + $0x1f8] sm:$0xff]
        %v381 = vld [vmem:[%s254 + $0x200] sm:$0xff]
        %v382 = vld [vmem:[%s254 + $0x208] sm:$0xff]
        %v383 = vld [vmem:[%s254 + $0x210] sm:$0xff]
        %v384 = vld [vmem:[%s254 + $0x218] sm:$0xff]
        %v385 = vld [vmem:[%s254 + $0x220] sm:$0xff]
        %v386 = vld [vmem:[%s254 + $0x228] sm:$0xff]
        %v387 = vld [vmem:[%s254 + $0x230] sm:$0xff]
        %v388 = vld [vmem:[%s254 + $0x238] sm:$0xff]
        %v389 = vld [vmem:[%s254 + $0x240] sm:$0xff]
        %v390 = vld [vmem:[%s254 + $0x248] sm:$0xff]
        %v391 = vld [vmem:[%s254 + $0x250] sm:$0xff]
        %v392 = vld [vmem:[%s254 + $0x258] sm:$0xff]
        %v393 = vld [vmem:[%s254 + $0x260] sm:$0xff]
        %v394 = vld [vmem:[%s254 + $0x268] sm:$0xff]
        %v395 = vld [vmem:[%s254 + $0x270] sm:$0xff]
        %v396 = vld [vmem:[%s254 + $0x278] sm:$0xff]
        %v397 = vld [vmem:[%s254 + $0x280] sm:$0xff]
        %v398 = vld [vmem:[%s254 + $0x288] sm:$0xff]
        %v399 = vld [vmem:[%s254 + $0x290] sm:$0xff]
        %v400 = vld [vmem:[%s254 + $0x298] sm:$0xff]
        %v401 = vld [vmem:[%s254 + $0x2a0] sm:$0xff]
        %v402 = vld [vmem:[%s254 + $0x2a8] sm:$0xff]
        %v403 = vld [vmem:[%s254 + $0x2b0] sm:$0xff]
        %v404 = vld [vmem:[%s254 + $0x2b8] sm:$0xff]
        %v405 = vld [vmem:[%s254 + $0x2c0] sm:$0xff]
        %v406 = vld [vmem:[%s254 + $0x2c8] sm:$0xff]
        %v407 = vld [vmem:[%s254 + $0x2d0] sm:$0xff]
        %v408 = vld [vmem:[%s254 + $0x2d8] sm:$0xff]
        %v409 = vld [vmem:[%s254 + $0x2e0] sm:$0xff]
        %v410 = vld [vmem:[%s254 + $0x2e8] sm:$0xff]
        %v411 = vld [vmem:[%s254 + $0x2f0] sm:$0xff]
        %v412 = vld [vmem:[%s254 + $0x2f8] sm:$0xff]
        %v413 = vld [vmem:[%s263] sm:$0xff]
        %v414 = vld [vmem:[%s263 + $0x8] sm:$0xff]
        %v415 = vld [vmem:[%s263 + $0x10] sm:$0xff]
        %v416 = vld [vmem:[%s263 + $0x18] sm:$0xff]
        %v417 = vld [vmem:[%s263 + $0x20] sm:$0xff]
        %v418 = vld [vmem:[%s263 + $0x28] sm:$0xff]
        %v419 = vld [vmem:[%s263 + $0x30] sm:$0xff]
        %v420 = vld [vmem:[%s263 + $0x38] sm:$0xff]
        %v421 = vld [vmem:[%s263 + $0x40] sm:$0xff]
        %v422 = vld [vmem:[%s263 + $0x48] sm:$0xff]
        %v423 = vld [vmem:[%s263 + $0x50] sm:$0xff]
        %v424 = vld [vmem:[%s263 + $0x58] sm:$0xff]
        %v425 = vld [vmem:[%s263 + $0x60] sm:$0xff]
        %v426 = vld [vmem:[%s263 + $0x68] sm:$0xff]
        %v427 = vld [vmem:[%s263 + $0x70] sm:$0xff]
        %v428 = vld [vmem:[%s263 + $0x78] sm:$0xff]
        %v429 = vld [vmem:[%s263 + $0x80] sm:$0xff]
        %v430 = vld [vmem:[%s263 + $0x88] sm:$0xff]
        %v431 = vld [vmem:[%s263 + $0x90] sm:$0xff]
        %v432 = vld [vmem:[%s263 + $0x98] sm:$0xff]
        %v433 = vld [vmem:[%s263 + $0xa0] sm:$0xff]
        %v434 = vld [vmem:[%s263 + $0xa8] sm:$0xff]
        %v435 = vld [vmem:[%s263 + $0xb0] sm:$0xff]
        %v436 = vld [vmem:[%s263 + $0xb8] sm:$0xff]
        %v437 = vld [vmem:[%s263 + $0xc0] sm:$0xff]
        %v438 = vld [vmem:[%s263 + $0xc8] sm:$0xff]
        %v439 = vld [vmem:[%s263 + $0xd0] sm:$0xff]
        %v440 = vld [vmem:[%s263 + $0xd8] sm:$0xff]
        %v441 = vld [vmem:[%s263 + $0xe0] sm:$0xff]
        %v442 = vld [vmem:[%s263 + $0xe8] sm:$0xff]
        %v443 = vld [vmem:[%s263 + $0xf0] sm:$0xff]
        %v444 = vld [vmem:[%s263 + $0xf8] sm:$0xff]
        %v445 = vld [vmem:[%s263 + $0x100] sm:$0xff]
        %v446 = vld [vmem:[%s263 + $0x108] sm:$0xff]
        %v447 = vld [vmem:[%s263 + $0x110] sm:$0xff]
        %v448 = vld [vmem:[%s263 + $0x118] sm:$0xff]
        %v449 = vld [vmem:[%s263 + $0x120] sm:$0xff]
        %v450 = vld [vmem:[%s263 + $0x128] sm:$0xff]
        %v451 = vld [vmem:[%s263 + $0x130] sm:$0xff]
        %v452 = vld [vmem:[%s263 + $0x138] sm:$0xff]
        %v453 = vld [vmem:[%s263 + $0x140] sm:$0xff]
        %v454 = vld [vmem:[%s263 + $0x148] sm:$0xff]
        %v455 = vld [vmem:[%s263 + $0x150] sm:$0xff]
        %v456 = vld [vmem:[%s263 + $0x158] sm:$0xff]
        %v457 = vld [vmem:[%s263 + $0x160] sm:$0xff]
        %v458 = vld [vmem:[%s263 + $0x168] sm:$0xff]
        %v459 = vld [vmem:[%s263 + $0x170] sm:$0xff]
        %v460 = vld [vmem:[%s263 + $0x178] sm:$0xff]
        %v461 = vld [vmem:[%s263 + $0x180] sm:$0xff]
        %v462 = vld [vmem:[%s263 + $0x188] sm:$0xff]
        %v463 = vld [vmem:[%s263 + $0x190] sm:$0xff]
        %v464 = vld [vmem:[%s263 + $0x198] sm:$0xff]
        %v465 = vld [vmem:[%s263 + $0x1a0] sm:$0xff]
        %v466 = vld [vmem:[%s263 + $0x1a8] sm:$0xff]
        %v467 = vld [vmem:[%s263 + $0x1b0] sm:$0xff]
        %v468 = vld [vmem:[%s263 + $0x1b8] sm:$0xff]
        %v469 = vld [vmem:[%s263 + $0x1c0] sm:$0xff]
        %v470 = vld [vmem:[%s263 + $0x1c8] sm:$0xff]
        %v471 = vld [vmem:[%s263 + $0x1d0] sm:$0xff]
        %v472 = vld [vmem:[%s263 + $0x1d8] sm:$0xff]
        %v473 = vld [vmem:[%s263 + $0x1e0] sm:$0xff]
        %v474 = vld [vmem:[%s263 + $0x1e8] sm:$0xff]
        %v475 = vld [vmem:[%s263 + $0x1f0] sm:$0xff]
        %v476 = vld [vmem:[%s263 + $0x1f8] sm:$0xff]
        %v477 = vld [vmem:[%s263 + $0x200] sm:$0xff]
        %v478 = vld [vmem:[%s263 + $0x208] sm:$0xff]
        %v479 = vld [vmem:[%s263 + $0x210] sm:$0xff]
        %v480 = vld [vmem:[%s263 + $0x218] sm:$0xff]
        %v481 = vld [vmem:[%s263 + $0x220] sm:$0xff]
        %v482 = vld [vmem:[%s263 + $0x228] sm:$0xff]
        %v483 = vld [vmem:[%s263 + $0x230] sm:$0xff]
        %v484 = vld [vmem:[%s263 + $0x238] sm:$0xff]
        %v485 = vld [vmem:[%s263 + $0x240] sm:$0xff]
        %v486 = vld [vmem:[%s263 + $0x248] sm:$0xff]
        %v487 = vld [vmem:[%s263 + $0x250] sm:$0xff]
        %v488 = vld [vmem:[%s263 + $0x258] sm:$0xff]
        %v489 = vld [vmem:[%s263 + $0x260] sm:$0xff]
        %v490 = vld [vmem:[%s263 + $0x268] sm:$0xff]
        %v491 = vld [vmem:[%s263 + $0x270] sm:$0xff]
        %v492 = vld [vmem:[%s263 + $0x278] sm:$0xff]
        %v493 = vld [vmem:[%s263 + $0x280] sm:$0xff]
        %v494 = vld [vmem:[%s263 + $0x288] sm:$0xff]
        %v495 = vld [vmem:[%s263 + $0x290] sm:$0xff]
        %v496 = vld [vmem:[%s263 + $0x298] sm:$0xff]
        %v497 = vld [vmem:[%s263 + $0x2a0] sm:$0xff]
        %v498 = vld [vmem:[%s263 + $0x2a8] sm:$0xff]
        %v499 = vld [vmem:[%s263 + $0x2b0] sm:$0xff]
        %v500 = vld [vmem:[%s263 + $0x2b8] sm:$0xff]
        %v501 = vld [vmem:[%s263 + $0x2c0] sm:$0xff]
        %v502 = vld [vmem:[%s263 + $0x2c8] sm:$0xff]
        %v503 = vld [vmem:[%s263 + $0x2d0] sm:$0xff]
        %v504 = vld [vmem:[%s263 + $0x2d8] sm:$0xff]
        %v505 = vld [vmem:[%s263 + $0x2e0] sm:$0xff]
        %v506 = vld [vmem:[%s263 + $0x2e8] sm:$0xff]
        %v507 = vld [vmem:[%s263 + $0x2f0] sm:$0xff]
        %v508 = vld [vmem:[%s263 + $0x2f8] sm:$0xff]
        %v605 = vunpack.c.l.b16 %v317
        %v606 = vunpack.c.h.b16 %v317
        %v607 = vunpack.c.l.b16 %v318
        %v608 = vunpack.c.h.b16 %v318
        %v609 = vunpack.c.l.b16 %v319
        %v610 = vunpack.c.h.b16 %v319
        %v611 = vunpack.c.l.b16 %v320
        %v612 = vunpack.c.h.b16 %v320
        %v613 = vunpack.c.l.b16 %v321
        %v614 = vunpack.c.h.b16 %v321
        %v615 = vunpack.c.l.b16 %v322
        %v616 = vunpack.c.h.b16 %v322
        %v617 = vunpack.c.l.b16 %v323
        %v618 = vunpack.c.h.b16 %v323
        %v619 = vunpack.c.l.b16 %v324
        %v620 = vunpack.c.h.b16 %v324
        %v621 = vunpack.c.l.b16 %v325
        %v622 = vunpack.c.h.b16 %v325
        %v623 = vunpack.c.l.b16 %v326
        %v624 = vunpack.c.h.b16 %v326
        %v625 = vunpack.c.l.b16 %v327
        %v626 = vunpack.c.h.b16 %v327
        %v627 = vunpack.c.l.b16 %v328
        %v628 = vunpack.c.h.b16 %v328
        %v629 = vunpack.c.l.b16 %v329
        %v630 = vunpack.c.h.b16 %v329
        %v631 = vunpack.c.l.b16 %v330
        %v632 = vunpack.c.h.b16 %v330
        %v633 = vunpack.c.l.b16 %v331
        %v634 = vunpack.c.h.b16 %v331
        %v635 = vunpack.c.l.b16 %v332
        %v636 = vunpack.c.h.b16 %v332
        %v637 = vunpack.c.l.b16 %v333
        %v638 = vunpack.c.h.b16 %v333
        %v639 = vunpack.c.l.b16 %v334
        %v640 = vunpack.c.h.b16 %v334
        %v641 = vunpack.c.l.b16 %v335
        %v642 = vunpack.c.h.b16 %v335
        %v643 = vunpack.c.l.b16 %v336
        %v644 = vunpack.c.h.b16 %v336
        %v645 = vunpack.c.l.b16 %v337
        %v646 = vunpack.c.h.b16 %v337
        %v647 = vunpack.c.l.b16 %v338
        %v648 = vunpack.c.h.b16 %v338
        %v649 = vunpack.c.l.b16 %v339
        %v650 = vunpack.c.h.b16 %v339
        %v651 = vunpack.c.l.b16 %v340
        %v652 = vunpack.c.h.b16 %v340
        %v653 = vunpack.c.l.b16 %v341
        %v654 = vunpack.c.h.b16 %v341
        %v655 = vunpack.c.l.b16 %v342
        %v656 = vunpack.c.h.b16 %v342
        %v657 = vunpack.c.l.b16 %v343
        %v658 = vunpack.c.h.b16 %v343
        %v659 = vunpack.c.l.b16 %v344
        %v660 = vunpack.c.h.b16 %v344
        %v661 = vunpack.c.l.b16 %v345
        %v662 = vunpack.c.h.b16 %v345
        %v663 = vunpack.c.l.b16 %v346
        %v664 = vunpack.c.h.b16 %v346
        %v665 = vunpack.c.l.b16 %v347
        %v666 = vunpack.c.h.b16 %v347
        %v667 = vunpack.c.l.b16 %v348
        %v668 = vunpack.c.h.b16 %v348
        %v669 = vunpack.c.l.b16 %v349
        %v670 = vunpack.c.h.b16 %v349
        %v671 = vunpack.c.l.b16 %v350
        %v672 = vunpack.c.h.b16 %v350
        %v673 = vunpack.c.l.b16 %v351
        %v674 = vunpack.c.h.b16 %v351
        %v675 = vunpack.c.l.b16 %v352
        %v676 = vunpack.c.h.b16 %v352
        %v677 = vunpack.c.l.b16 %v353
        %v678 = vunpack.c.h.b16 %v353
        %v679 = vunpack.c.l.b16 %v354
        %v680 = vunpack.c.h.b16 %v354
        %v681 = vunpack.c.l.b16 %v355
        %v682 = vunpack.c.h.b16 %v355
        %v683 = vunpack.c.l.b16 %v356
        %v684 = vunpack.c.h.b16 %v356
        %v685 = vunpack.c.l.b16 %v357
        %v686 = vunpack.c.h.b16 %v357
        %v687 = vunpack.c.l.b16 %v358
        %v688 = vunpack.c.h.b16 %v358
        %v689 = vunpack.c.l.b16 %v359
        %v690 = vunpack.c.h.b16 %v359
        %v691 = vunpack.c.l.b16 %v360
        %v692 = vunpack.c.h.b16 %v360
        %v693 = vunpack.c.l.b16 %v361
        %v694 = vunpack.c.h.b16 %v361
        %v695 = vunpack.c.l.b16 %v362
        %v696 = vunpack.c.h.b16 %v362
        %v697 = vunpack.c.l.b16 %v363
        %v698 = vunpack.c.h.b16 %v363
        %v699 = vunpack.c.l.b16 %v364
        %v700 = vunpack.c.h.b16 %v364
        %v701 = vunpack.c.l.b16 %v365
        %v702 = vunpack.c.h.b16 %v365
        %v703 = vunpack.c.l.b16 %v366
        %v704 = vunpack.c.h.b16 %v366
        %v705 = vunpack.c.l.b16 %v367
        %v706 = vunpack.c.h.b16 %v367
        %v707 = vunpack.c.l.b16 %v368
        %v708 = vunpack.c.h.b16 %v368
        %v709 = vunpack.c.l.b16 %v369
        %v710 = vunpack.c.h.b16 %v369
        %v711 = vunpack.c.l.b16 %v370
        %v712 = vunpack.c.h.b16 %v370
        %v713 = vunpack.c.l.b16 %v371
        %v714 = vunpack.c.h.b16 %v371
        %v715 = vunpack.c.l.b16 %v372
        %v716 = vunpack.c.h.b16 %v372
        %v717 = vunpack.c.l.b16 %v373
        %v718 = vunpack.c.h.b16 %v373
        %v719 = vunpack.c.l.b16 %v374
        %v720 = vunpack.c.h.b16 %v374
        %v721 = vunpack.c.l.b16 %v375
        %v722 = vunpack.c.h.b16 %v375
        %v723 = vunpack.c.l.b16 %v376
        %v724 = vunpack.c.h.b16 %v376
        %v725 = vunpack.c.l.b16 %v377
        %v726 = vunpack.c.h.b16 %v377
        %v727 = vunpack.c.l.b16 %v378
        %v728 = vunpack.c.h.b16 %v378
        %v729 = vunpack.c.l.b16 %v379
        %v730 = vunpack.c.h.b16 %v379
        %v731 = vunpack.c.l.b16 %v380
        %v732 = vunpack.c.h.b16 %v380
        %v733 = vunpack.c.l.b16 %v381
        %v734 = vunpack.c.h.b16 %v381
        %v735 = vunpack.c.l.b16 %v382
        %v736 = vunpack.c.h.b16 %v382
        %v737 = vunpack.c.l.b16 %v383
        %v738 = vunpack.c.h.b16 %v383
        %v739 = vunpack.c.l.b16 %v384
        %v740 = vunpack.c.h.b16 %v384
        %v741 = vunpack.c.l.b16 %v385
        %v742 = vunpack.c.h.b16 %v385
        %v743 = vunpack.c.l.b16 %v386
        %v744 = vunpack.c.h.b16 %v386
        %v745 = vunpack.c.l.b16 %v387
        %v746 = vunpack.c.h.b16 %v387
        %v747 = vunpack.c.l.b16 %v388
        %v748 = vunpack.c.h.b16 %v388
        %v749 = vunpack.c.l.b16 %v389
        %v750 = vunpack.c.h.b16 %v389
        %v751 = vunpack.c.l.b16 %v390
        %v752 = vunpack.c.h.b16 %v390
        %v753 = vunpack.c.l.b16 %v391
        %v754 = vunpack.c.h.b16 %v391
        %v755 = vunpack.c.l.b16 %v392
        %v756 = vunpack.c.h.b16 %v392
        %v757 = vunpack.c.l.b16 %v393
        %v758 = vunpack.c.h.b16 %v393
        %v759 = vunpack.c.l.b16 %v394
        %v760 = vunpack.c.h.b16 %v394
        %v761 = vunpack.c.l.b16 %v395
        %v762 = vunpack.c.h.b16 %v395
        %v763 = vunpack.c.l.b16 %v396
        %v764 = vunpack.c.h.b16 %v396
        %v765 = vunpack.c.l.b16 %v397
        %v766 = vunpack.c.h.b16 %v397
        %v767 = vunpack.c.l.b16 %v398
        %v768 = vunpack.c.h.b16 %v398
        %v769 = vunpack.c.l.b16 %v399
        %v770 = vunpack.c.h.b16 %v399
        %v771 = vunpack.c.l.b16 %v400
        %v772 = vunpack.c.h.b16 %v400
        %v773 = vunpack.c.l.b16 %v401
        %v774 = vunpack.c.h.b16 %v401
        %v775 = vunpack.c.l.b16 %v402
        %v776 = vunpack.c.h.b16 %v402
        %v777 = vunpack.c.l.b16 %v403
        %v778 = vunpack.c.h.b16 %v403
        %v779 = vunpack.c.l.b16 %v404
        %v780 = vunpack.c.h.b16 %v404
        %v781 = vunpack.c.l.b16 %v405
        %v782 = vunpack.c.h.b16 %v405
        %v783 = vunpack.c.l.b16 %v406
        %v784 = vunpack.c.h.b16 %v406
        %v785 = vunpack.c.l.b16 %v407
        %v786 = vunpack.c.h.b16 %v407
        %v787 = vunpack.c.l.b16 %v408
        %v788 = vunpack.c.h.b16 %v408
        %v789 = vunpack.c.l.b16 %v409
        %v790 = vunpack.c.h.b16 %v409
        %v791 = vunpack.c.l.b16 %v410
        %v792 = vunpack.c.h.b16 %v410
        %v793 = vunpack.c.l.b16 %v411
        %v794 = vunpack.c.h.b16 %v411
        %v795 = vunpack.c.l.b16 %v412
        %v796 = vunpack.c.h.b16 %v412
        %v797 = vpack.c.b16 %v611, %v605
        %v798 = vpack.c.b16 %v612, %v606
        %v799 = vpack.c.b16 %v613, %v607
        %v800 = vpack.c.b16 %v614, %v608
        %v801 = vpack.c.b16 %v615, %v609
        %v802 = vpack.c.b16 %v616, %v610
        %v803 = vpack.c.b16 %v623, %v617
        %v804 = vpack.c.b16 %v624, %v618
        %v805 = vpack.c.b16 %v625, %v619
        %v806 = vpack.c.b16 %v626, %v620
        %v807 = vpack.c.b16 %v627, %v621
        %v808 = vpack.c.b16 %v628, %v622
        %v809 = vpack.c.b16 %v635, %v629
        %v810 = vpack.c.b16 %v636, %v630
        %v811 = vpack.c.b16 %v637, %v631
        %v812 = vpack.c.b16 %v638, %v632
        %v813 = vpack.c.b16 %v639, %v633
        %v814 = vpack.c.b16 %v640, %v634
        %v815 = vpack.c.b16 %v647, %v641
        %v816 = vpack.c.b16 %v648, %v642
        %v817 = vpack.c.b16 %v649, %v643
        %v818 = vpack.c.b16 %v650, %v644
        %v819 = vpack.c.b16 %v651, %v645
        %v820 = vpack.c.b16 %v652, %v646
        %v821 = vpack.c.b16 %v659, %v653
        %v822 = vpack.c.b16 %v660, %v654
        %v823 = vpack.c.b16 %v661, %v655
        %v824 = vpack.c.b16 %v662, %v656
        %v825 = vpack.c.b16 %v663, %v657
        %v826 = vpack.c.b16 %v664, %v658
        %v827 = vpack.c.b16 %v671, %v665
        %v828 = vpack.c.b16 %v672, %v666
        %v829 = vpack.c.b16 %v673, %v667
        %v830 = vpack.c.b16 %v674, %v668
        %v831 = vpack.c.b16 %v675, %v669
        %v832 = vpack.c.b16 %v676, %v670
        %v833 = vpack.c.b16 %v683, %v677
        %v834 = vpack.c.b16 %v684, %v678
        %v835 = vpack.c.b16 %v685, %v679
        %v836 = vpack.c.b16 %v686, %v680
        %v837 = vpack.c.b16 %v687, %v681
        %v838 = vpack.c.b16 %v688, %v682
        %v839 = vpack.c.b16 %v695, %v689
        %v840 = vpack.c.b16 %v696, %v690
        %v841 = vpack.c.b16 %v697, %v691
        %v842 = vpack.c.b16 %v698, %v692
        %v843 = vpack.c.b16 %v699, %v693
        %v844 = vpack.c.b16 %v700, %v694
        %v845 = vpack.c.b16 %v707, %v701
        %v846 = vpack.c.b16 %v708, %v702
        %v847 = vpack.c.b16 %v709, %v703
        %v848 = vpack.c.b16 %v710, %v704
        %v849 = vpack.c.b16 %v711, %v705
        %v850 = vpack.c.b16 %v712, %v706
        %v851 = vpack.c.b16 %v719, %v713
        %v852 = vpack.c.b16 %v720, %v714
        %v853 = vpack.c.b16 %v721, %v715
        %v854 = vpack.c.b16 %v722, %v716
        %v855 = vpack.c.b16 %v723, %v717
        %v856 = vpack.c.b16 %v724, %v718
        %v857 = vpack.c.b16 %v731, %v725
        %v858 = vpack.c.b16 %v732, %v726
        %v859 = vpack.c.b16 %v733, %v727
        %v860 = vpack.c.b16 %v734, %v728
        %v861 = vpack.c.b16 %v735, %v729
        %v862 = vpack.c.b16 %v736, %v730
        %v863 = vpack.c.b16 %v743, %v737
        %v864 = vpack.c.b16 %v744, %v738
        %v865 = vpack.c.b16 %v745, %v739
        %v866 = vpack.c.b16 %v746, %v740
        %v867 = vpack.c.b16 %v747, %v741
        %v868 = vpack.c.b16 %v748, %v742
        %v869 = vpack.c.b16 %v755, %v749
        %v870 = vpack.c.b16 %v756, %v750
        %v871 = vpack.c.b16 %v757, %v751
        %v872 = vpack.c.b16 %v758, %v752
        %v873 = vpack.c.b16 %v759, %v753
        %v874 = vpack.c.b16 %v760, %v754
        %v875 = vpack.c.b16 %v767, %v761
        %v876 = vpack.c.b16 %v768, %v762
        %v877 = vpack.c.b16 %v769, %v763
        %v878 = vpack.c.b16 %v770, %v764
        %v879 = vpack.c.b16 %v771, %v765
        %v880 = vpack.c.b16 %v772, %v766
        %v881 = vpack.c.b16 %v779, %v773
        %v882 = vpack.c.b16 %v780, %v774
        %v883 = vpack.c.b16 %v781, %v775
        %v884 = vpack.c.b16 %v782, %v776
        %v885 = vpack.c.b16 %v783, %v777
        %v886 = vpack.c.b16 %v784, %v778
        %v887 = vpack.c.b16 %v791, %v785
        %v888 = vpack.c.b16 %v792, %v786
        %v889 = vpack.c.b16 %v793, %v787
        %v890 = vpack.c.b16 %v794, %v788
        %v891 = vpack.c.b16 %v795, %v789
        %v892 = vpack.c.b16 %v796, %v790
        %v1085 = vunpack.c.l.b16 %v413
        %v1086 = vunpack.c.h.b16 %v413
        %v1087 = vunpack.c.l.b16 %v414
        %v1088 = vunpack.c.h.b16 %v414
        %v1089 = vunpack.c.l.b16 %v415
        %v1090 = vunpack.c.h.b16 %v415
        %v1091 = vunpack.c.l.b16 %v416
        %v1092 = vunpack.c.h.b16 %v416
        %v1093 = vunpack.c.l.b16 %v417
        %v1094 = vunpack.c.h.b16 %v417
        %v1095 = vunpack.c.l.b16 %v418
        %v1096 = vunpack.c.h.b16 %v418
        %v1097 = vunpack.c.l.b16 %v419
        %v1098 = vunpack.c.h.b16 %v419
        %v1099 = vunpack.c.l.b16 %v420
        %v1100 = vunpack.c.h.b16 %v420
        %v1101 = vunpack.c.l.b16 %v421
        %v1102 = vunpack.c.h.b16 %v421
        %v1103 = vunpack.c.l.b16 %v422
        %v1104 = vunpack.c.h.b16 %v422
        %v1105 = vunpack.c.l.b16 %v423
        %v1106 = vunpack.c.h.b16 %v423
        %v1107 = vunpack.c.l.b16 %v424
        %v1108 = vunpack.c.h.b16 %v424
        %v1109 = vunpack.c.l.b16 %v425
        %v1110 = vunpack.c.h.b16 %v425
        %v1111 = vunpack.c.l.b16 %v426
        %v1112 = vunpack.c.h.b16 %v426
        %v1113 = vunpack.c.l.b16 %v427
        %v1114 = vunpack.c.h.b16 %v427
        %v1115 = vunpack.c.l.b16 %v428
        %v1116 = vunpack.c.h.b16 %v428
        %v1117 = vunpack.c.l.b16 %v429
        %v1118 = vunpack.c.h.b16 %v429
        %v1119 = vunpack.c.l.b16 %v430
        %v1120 = vunpack.c.h.b16 %v430
        %v1121 = vunpack.c.l.b16 %v431
        %v1122 = vunpack.c.h.b16 %v431
        %v1123 = vunpack.c.l.b16 %v432
        %v1124 = vunpack.c.h.b16 %v432
        %v1125 = vunpack.c.l.b16 %v433
        %v1126 = vunpack.c.h.b16 %v433
        %v1127 = vunpack.c.l.b16 %v434
        %v1128 = vunpack.c.h.b16 %v434
        %v1129 = vunpack.c.l.b16 %v435
        %v1130 = vunpack.c.h.b16 %v435
        %v1131 = vunpack.c.l.b16 %v436
        %v1132 = vunpack.c.h.b16 %v436
        %v1133 = vunpack.c.l.b16 %v437
        %v1134 = vunpack.c.h.b16 %v437
        %v1135 = vunpack.c.l.b16 %v438
        %v1136 = vunpack.c.h.b16 %v438
        %v1137 = vunpack.c.l.b16 %v439
        %v1138 = vunpack.c.h.b16 %v439
        %v1139 = vunpack.c.l.b16 %v440
        %v1140 = vunpack.c.h.b16 %v440
        %v1141 = vunpack.c.l.b16 %v441
        %v1142 = vunpack.c.h.b16 %v441
        %v1143 = vunpack.c.l.b16 %v442
        %v1144 = vunpack.c.h.b16 %v442
        %v1145 = vunpack.c.l.b16 %v443
        %v1146 = vunpack.c.h.b16 %v443
        %v1147 = vunpack.c.l.b16 %v444
        %v1148 = vunpack.c.h.b16 %v444
        %v1149 = vunpack.c.l.b16 %v445
        %v1150 = vunpack.c.h.b16 %v445
        %v1151 = vunpack.c.l.b16 %v446
        %v1152 = vunpack.c.h.b16 %v446
        %v1153 = vunpack.c.l.b16 %v447
        %v1154 = vunpack.c.h.b16 %v447
        %v1155 = vunpack.c.l.b16 %v448
        %v1156 = vunpack.c.h.b16 %v448
        %v1157 = vunpack.c.l.b16 %v449
        %v1158 = vunpack.c.h.b16 %v449
        %v1159 = vunpack.c.l.b16 %v450
        %v1160 = vunpack.c.h.b16 %v450
        %v1161 = vunpack.c.l.b16 %v451
        %v1162 = vunpack.c.h.b16 %v451
        %v1163 = vunpack.c.l.b16 %v452
        %v1164 = vunpack.c.h.b16 %v452
        %v1165 = vunpack.c.l.b16 %v453
        %v1166 = vunpack.c.h.b16 %v453
        %v1167 = vunpack.c.l.b16 %v454
        %v1168 = vunpack.c.h.b16 %v454
        %v1169 = vunpack.c.l.b16 %v455
        %v1170 = vunpack.c.h.b16 %v455
        %v1171 = vunpack.c.l.b16 %v456
        %v1172 = vunpack.c.h.b16 %v456
        %v1173 = vunpack.c.l.b16 %v457
        %v1174 = vunpack.c.h.b16 %v457
        %v1175 = vunpack.c.l.b16 %v458
        %v1176 = vunpack.c.h.b16 %v458
        %v1177 = vunpack.c.l.b16 %v459
        %v1178 = vunpack.c.h.b16 %v459
        %v1179 = vunpack.c.l.b16 %v460
        %v1180 = vunpack.c.h.b16 %v460
        %v1181 = vunpack.c.l.b16 %v461
        %v1182 = vunpack.c.h.b16 %v461
        %v1183 = vunpack.c.l.b16 %v462
        %v1184 = vunpack.c.h.b16 %v462
        %v1185 = vunpack.c.l.b16 %v463
        %v1186 = vunpack.c.h.b16 %v463
        %v1187 = vunpack.c.l.b16 %v464
        %v1188 = vunpack.c.h.b16 %v464
        %v1189 = vunpack.c.l.b16 %v465
        %v1190 = vunpack.c.h.b16 %v465
        %v1191 = vunpack.c.l.b16 %v466
        %v1192 = vunpack.c.h.b16 %v466
        %v1193 = vunpack.c.l.b16 %v467
        %v1194 = vunpack.c.h.b16 %v467
        %v1195 = vunpack.c.l.b16 %v468
        %v1196 = vunpack.c.h.b16 %v468
        %v1197 = vunpack.c.l.b16 %v469
        %v1198 = vunpack.c.h.b16 %v469
        %v1199 = vunpack.c.l.b16 %v470
        %v1200 = vunpack.c.h.b16 %v470
        %v1201 = vunpack.c.l.b16 %v471
        %v1202 = vunpack.c.h.b16 %v471
        %v1203 = vunpack.c.l.b16 %v472
        %v1204 = vunpack.c.h.b16 %v472
        %v1205 = vunpack.c.l.b16 %v473
        %v1206 = vunpack.c.h.b16 %v473
        %v1207 = vunpack.c.l.b16 %v474
        %v1208 = vunpack.c.h.b16 %v474
        %v1209 = vunpack.c.l.b16 %v475
        %v1210 = vunpack.c.h.b16 %v475
        %v1211 = vunpack.c.l.b16 %v476
        %v1212 = vunpack.c.h.b16 %v476
        %v1213 = vunpack.c.l.b16 %v477
        %v1214 = vunpack.c.h.b16 %v477
        %v1215 = vunpack.c.l.b16 %v478
        %v1216 = vunpack.c.h.b16 %v478
        %v1217 = vunpack.c.l.b16 %v479
        %v1218 = vunpack.c.h.b16 %v479
        %v1219 = vunpack.c.l.b16 %v480
        %v1220 = vunpack.c.h.b16 %v480
        %v1221 = vunpack.c.l.b16 %v481
        %v1222 = vunpack.c.h.b16 %v481
        %v1223 = vunpack.c.l.b16 %v482
        %v1224 = vunpack.c.h.b16 %v482
        %v1225 = vunpack.c.l.b16 %v483
        %v1226 = vunpack.c.h.b16 %v483
        %v1227 = vunpack.c.l.b16 %v484
        %v1228 = vunpack.c.h.b16 %v484
        %v1229 = vunpack.c.l.b16 %v485
        %v1230 = vunpack.c.h.b16 %v485
        %v1231 = vunpack.c.l.b16 %v486
        %v1232 = vunpack.c.h.b16 %v486
        %v1233 = vunpack.c.l.b16 %v487
        %v1234 = vunpack.c.h.b16 %v487
        %v1235 = vunpack.c.l.b16 %v488
        %v1236 = vunpack.c.h.b16 %v488
        %v1237 = vunpack.c.l.b16 %v489
        %v1238 = vunpack.c.h.b16 %v489
        %v1239 = vunpack.c.l.b16 %v490
        %v1240 = vunpack.c.h.b16 %v490
        %v1241 = vunpack.c.l.b16 %v491
        %v1242 = vunpack.c.h.b16 %v491
        %v1243 = vunpack.c.l.b16 %v492
        %v1244 = vunpack.c.h.b16 %v492
        %v1245 = vunpack.c.l.b16 %v493
        %v1246 = vunpack.c.h.b16 %v493
        %v1247 = vunpack.c.l.b16 %v494
        %v1248 = vunpack.c.h.b16 %v494
        %v1249 = vunpack.c.l.b16 %v495
        %v1250 = vunpack.c.h.b16 %v495
        %v1251 = vunpack.c.l.b16 %v496
        %v1252 = vunpack.c.h.b16 %v496
        %v1253 = vunpack.c.l.b16 %v497
        %v1254 = vunpack.c.h.b16 %v497
        %v1255 = vunpack.c.l.b16 %v498
        %v1256 = vunpack.c.h.b16 %v498
        %v1257 = vunpack.c.l.b16 %v499
        %v1258 = vunpack.c.h.b16 %v499
        %v1259 = vunpack.c.l.b16 %v500
        %v1260 = vunpack.c.h.b16 %v500
        %v1261 = vunpack.c.l.b16 %v501
        %v1262 = vunpack.c.h.b16 %v501
        %v1263 = vunpack.c.l.b16 %v502
        %v1264 = vunpack.c.h.b16 %v502
        %v1265 = vunpack.c.l.b16 %v503
        %v1266 = vunpack.c.h.b16 %v503
        %v1267 = vunpack.c.l.b16 %v504
        %v1268 = vunpack.c.h.b16 %v504
        %v1269 = vunpack.c.l.b16 %v505
        %v1270 = vunpack.c.h.b16 %v505
        %v1271 = vunpack.c.l.b16 %v506
        %v1272 = vunpack.c.h.b16 %v506
        %v1273 = vunpack.c.l.b16 %v507
        %v1274 = vunpack.c.h.b16 %v507
        %v1275 = vunpack.c.l.b16 %v508
        %v1276 = vunpack.c.h.b16 %v508
        %v1277 = vpack.c.b16 %v1091, %v1085
        %v1278 = vpack.c.b16 %v1092, %v1086
        %v1279 = vpack.c.b16 %v1093, %v1087
        %v1280 = vpack.c.b16 %v1094, %v1088
        %v1281 = vpack.c.b16 %v1095, %v1089
        %v1282 = vpack.c.b16 %v1096, %v1090
        %v1283 = vpack.c.b16 %v1103, %v1097
        %v1284 = vpack.c.b16 %v1104, %v1098
        %v1285 = vpack.c.b16 %v1105, %v1099
        %v1286 = vpack.c.b16 %v1106, %v1100
        %v1287 = vpack.c.b16 %v1107, %v1101
        %v1288 = vpack.c.b16 %v1108, %v1102
        %v1289 = vpack.c.b16 %v1115, %v1109
        %v1290 = vpack.c.b16 %v1116, %v1110
        %v1291 = vpack.c.b16 %v1117, %v1111
        %v1292 = vpack.c.b16 %v1118, %v1112
        %v1293 = vpack.c.b16 %v1119, %v1113
        %v1294 = vpack.c.b16 %v1120, %v1114
        %v1295 = vpack.c.b16 %v1127, %v1121
        %v1296 = vpack.c.b16 %v1128, %v1122
        %v1297 = vpack.c.b16 %v1129, %v1123
        %v1298 = vpack.c.b16 %v1130, %v1124
        %v1299 = vpack.c.b16 %v1131, %v1125
        %v1300 = vpack.c.b16 %v1132, %v1126
        %v1301 = vpack.c.b16 %v1139, %v1133
        %v1302 = vpack.c.b16 %v1140, %v1134
        %v1303 = vpack.c.b16 %v1141, %v1135
        %v1304 = vpack.c.b16 %v1142, %v1136
        %v1305 = vpack.c.b16 %v1143, %v1137
        %v1306 = vpack.c.b16 %v1144, %v1138
        %v1307 = vpack.c.b16 %v1151, %v1145
        %v1308 = vpack.c.b16 %v1152, %v1146
        %v1309 = vpack.c.b16 %v1153, %v1147
        %v1310 = vpack.c.b16 %v1154, %v1148
        %v1311 = vpack.c.b16 %v1155, %v1149
        %v1312 = vpack.c.b16 %v1156, %v1150
        %v1313 = vpack.c.b16 %v1163, %v1157
        %v1314 = vpack.c.b16 %v1164, %v1158
        %v1315 = vpack.c.b16 %v1165, %v1159
        %v1316 = vpack.c.b16 %v1166, %v1160
        %v1317 = vpack.c.b16 %v1167, %v1161
        %v1318 = vpack.c.b16 %v1168, %v1162
        %v1319 = vpack.c.b16 %v1175, %v1169
        %v1320 = vpack.c.b16 %v1176, %v1170
        %v1321 = vpack.c.b16 %v1177, %v1171
        %v1322 = vpack.c.b16 %v1178, %v1172
        %v1323 = vpack.c.b16 %v1179, %v1173
        %v1324 = vpack.c.b16 %v1180, %v1174
        %v1325 = vpack.c.b16 %v1187, %v1181
        %v1326 = vpack.c.b16 %v1188, %v1182
        %v1327 = vpack.c.b16 %v1189, %v1183
        %v1328 = vpack.c.b16 %v1190, %v1184
        %v1329 = vpack.c.b16 %v1191, %v1185
        %v1330 = vpack.c.b16 %v1192, %v1186
        %v1331 = vpack.c.b16 %v1199, %v1193
        %v1332 = vpack.c.b16 %v1200, %v1194
        %v1333 = vpack.c.b16 %v1201, %v1195
        %v1334 = vpack.c.b16 %v1202, %v1196
        %v1335 = vpack.c.b16 %v1203, %v1197
        %v1336 = vpack.c.b16 %v1204, %v1198
        %v1337 = vpack.c.b16 %v1211, %v1205
        %v1338 = vpack.c.b16 %v1212, %v1206
        %v1339 = vpack.c.b16 %v1213, %v1207
        %v1340 = vpack.c.b16 %v1214, %v1208
        %v1341 = vpack.c.b16 %v1215, %v1209
        %v1342 = vpack.c.b16 %v1216, %v1210
        %v1343 = vpack.c.b16 %v1223, %v1217
        %v1344 = vpack.c.b16 %v1224, %v1218
        %v1345 = vpack.c.b16 %v1225, %v1219
        %v1346 = vpack.c.b16 %v1226, %v1220
        %v1347 = vpack.c.b16 %v1227, %v1221
        %v1348 = vpack.c.b16 %v1228, %v1222
        %v1349 = vpack.c.b16 %v1235, %v1229
        %v1350 = vpack.c.b16 %v1236, %v1230
        %v1351 = vpack.c.b16 %v1237, %v1231
        %v1352 = vpack.c.b16 %v1238, %v1232
        %v1353 = vpack.c.b16 %v1239, %v1233
        %v1354 = vpack.c.b16 %v1240, %v1234
        %v1355 = vpack.c.b16 %v1247, %v1241
        %v1356 = vpack.c.b16 %v1248, %v1242
        %v1357 = vpack.c.b16 %v1249, %v1243
        %v1358 = vpack.c.b16 %v1250, %v1244
        %v1359 = vpack.c.b16 %v1251, %v1245
        %v1360 = vpack.c.b16 %v1252, %v1246
        %v1361 = vpack.c.b16 %v1259, %v1253
        %v1362 = vpack.c.b16 %v1260, %v1254
        %v1363 = vpack.c.b16 %v1261, %v1255
        %v1364 = vpack.c.b16 %v1262, %v1256
        %v1365 = vpack.c.b16 %v1263, %v1257
        %v1366 = vpack.c.b16 %v1264, %v1258
        %v1367 = vpack.c.b16 %v1271, %v1265
        %v1368 = vpack.c.b16 %v1272, %v1266
        %v1369 = vpack.c.b16 %v1273, %v1267
        %v1370 = vpack.c.b16 %v1274, %v1268
        %v1371 = vpack.c.b16 %v1275, %v1269
        %v1372 = vpack.c.b16 %v1276, %v1270
        %1469 = vmatprep.subr.bf16.mxu0 %v1278
        %1470 = vmatpush1.bf16.xpose.msra.mxu0 %v1277
        %1471 = vmatprep.subr.bf16.mxu0 %v1284
        %1472 = vmatpush1.bf16.xpose.msra.mxu0 %v1283
        %1473 = vmatprep.subr.bf16.mxu0 %v1290
        %1474 = vmatpush1.bf16.xpose.msra.mxu0 %v1289
        %1475 = vmatprep.subr.bf16.mxu0 %v1296
        %1476 = vmatpush1.bf16.xpose.msra.mxu0 %v1295
        %1477 = vmatprep.subr.bf16.mxu0 %v1302
        %1478 = vmatpush1.bf16.xpose.msra.mxu0 %v1301
        %1479 = vmatprep.subr.bf16.mxu0 %v1308
        %1480 = vmatpush1.bf16.xpose.msra.mxu0 %v1307
        %1481 = vmatprep.subr.bf16.mxu0 %v1314
        %1482 = vmatpush1.bf16.xpose.msra.mxu0 %v1313
        %1483 = vmatprep.subr.bf16.mxu0 %v1320
        %1484 = vmatpush1.bf16.xpose.msra.mxu0 %v1319
        %1485 = vmatprep.subr.bf16.mxu0 %v1326
        %1486 = vmatpush1.bf16.xpose.msra.mxu0 %v1325
        %1487 = vmatprep.subr.bf16.mxu0 %v1332
        %1488 = vmatpush1.bf16.xpose.msra.mxu0 %v1331
        %1489 = vmatprep.subr.bf16.mxu0 %v1338
        %1490 = vmatpush1.bf16.xpose.msra.mxu0 %v1337
        %1491 = vmatprep.subr.bf16.mxu0 %v1344
        %1492 = vmatpush1.bf16.xpose.msra.mxu0 %v1343
        %1493 = vmatprep.subr.bf16.mxu0 %v1350
        %1494 = vmatpush1.bf16.xpose.msra.mxu0 %v1349
        %1495 = vmatprep.subr.bf16.mxu0 %v1356
        %1496 = vmatpush1.bf16.xpose.msra.mxu0 %v1355
        %1497 = vmatprep.subr.bf16.mxu0 %v1362
        %1498 = vmatpush1.bf16.xpose.msra.mxu0 %v1361
        %1499 = vmatprep.subr.bf16.mxu0 %v1368
        %1500 = vmatpush1.bf16.xpose.msra.mxu0 %v1367
        %1501 = vmatprep.mubr.bf16.mxu0 %v798
        %1502 = vmatmul.mubr.bf16.gmra.mrb[0].mxu0 %v797
        %v1503 = vpop.f32.mrb[0].mxu0
        %v1504 = vadd.f32 0.0, %v1503
        %v1505 = vpop.f32.mrb[0].mxu0
        %v1506 = vadd.f32 0.0, %v1505
        %v1507 = vpop.f32.mrb[0].mxu0
        %v1508 = vadd.f32 0.0, %v1507
        %v1509 = vpop.f32.mrb[0].mxu0
        %v1510 = vadd.f32 0.0, %v1509
        %1511 = vmatprep.mubr.bf16.mxu0 %v804
        %1512 = vmatmul.mubr.bf16.gmra.mrb[0].mxu0 %v803
        %v1513 = vpop.f32.mrb[0].mxu0
        %v1514 = vadd.f32 0.0, %v1513
        %v1515 = vpop.f32.mrb[0].mxu0
        %v1516 = vadd.f32 0.0, %v1515
        %v1517 = vpop.f32.mrb[0].mxu0
        %v1518 = vadd.f32 0.0, %v1517
        %v1519 = vpop.f32.mrb[0].mxu0
        %v1520 = vadd.f32 0.0, %v1519
        %1521 = vmatprep.mubr.bf16.mxu0 %v810
        %1522 = vmatmul.mubr.bf16.gmra.mrb[0].mxu0 %v809
        %v1523 = vpop.f32.mrb[0].mxu0
        %v1524 = vadd.f32 0.0, %v1523
        %v1525 = vpop.f32.mrb[0].mxu0
        %v1526 = vadd.f32 0.0, %v1525
        %v1527 = vpop.f32.mrb[0].mxu0
        %v1528 = vadd.f32 0.0, %v1527
        %v1529 = vpop.f32.mrb[0].mxu0
        %v1530 = vadd.f32 0.0, %v1529
        %1531 = vmatprep.mubr.bf16.mxu0 %v816
        %1532 = vmatmul.mubr.bf16.gmra.mrb[0].mxu0 %v815
        %v1533 = vpop.f32.mrb[0].mxu0
        %v1534 = vadd.f32 0.0, %v1533
        %v1535 = vpop.f32.mrb[0].mxu0
        %v1536 = vadd.f32 0.0, %v1535
        %v1537 = vpop.f32.mrb[0].mxu0
        %v1538 = vadd.f32 0.0, %v1537
        %v1539 = vpop.f32.mrb[0].mxu0
        %v1540 = vadd.f32 0.0, %v1539
        %1541 = vmatprep.mubr.bf16.mxu0 %v822
        %1542 = vmatmul.mubr.bf16.gmra.mrb[0].mxu0 %v821
        %v1543 = vpop.f32.mrb[0].mxu0
        %v1544 = vadd.f32 0.0, %v1543
        %v1545 = vpop.f32.mrb[0].mxu0
        %v1546 = vadd.f32 0.0, %v1545
        %v1547 = vpop.f32.mrb[0].mxu0
        %v1548 = vadd.f32 0.0, %v1547
        %v1549 = vpop.f32.mrb[0].mxu0
        %v1550 = vadd.f32 0.0, %v1549
        %1551 = vmatprep.mubr.bf16.mxu0 %v828
        %1552 = vmatmul.mubr.bf16.gmra.mrb[0].mxu0 %v827
        %v1553 = vpop.f32.mrb[0].mxu0
        %v1554 = vadd.f32 0.0, %v1553
        %v1555 = vpop.f32.mrb[0].mxu0
        %v1556 = vadd.f32 0.0, %v1555
        %v1557 = vpop.f32.mrb[0].mxu0
        %v1558 = vadd.f32 0.0, %v1557
        %v1559 = vpop.f32.mrb[0].mxu0
        %v1560 = vadd.f32 0.0, %v1559
        %1561 = vmatprep.mubr.bf16.mxu0 %v834
        %1562 = vmatmul.mubr.bf16.gmra.mrb[0].mxu0 %v833
        %v1563 = vpop.f32.mrb[0].mxu0
        %v1564 = vadd.f32 0.0, %v1563
        %v1565 = vpop.f32.mrb[0].mxu0
        %v1566 = vadd.f32 0.0, %v1565
        %v1567 = vpop.f32.mrb[0].mxu0
        %v1568 = vadd.f32 0.0, %v1567
        %v1569 = vpop.f32.mrb[0].mxu0
        %v1570 = vadd.f32 0.0, %v1569
        %1571 = vmatprep.mubr.bf16.mxu0 %v840
        %1572 = vmatmul.mubr.bf16.gmra.mrb[0].mxu0 %v839
        %v1573 = vpop.f32.mrb[0].mxu0
        %v1574 = vadd.f32 0.0, %v1573
        %v1575 = vpop.f32.mrb[0].mxu0
        %v1576 = vadd.f32 0.0, %v1575
        %v1577 = vpop.f32.mrb[0].mxu0
        %v1578 = vadd.f32 0.0, %v1577
        %v1579 = vpop.f32.mrb[0].mxu0
        %v1580 = vadd.f32 0.0, %v1579
        %1581 = vmatprep.mubr.bf16.mxu0 %v846
        %1582 = vmatmul.mubr.bf16.gmra.mrb[0].mxu0 %v845
        %v1583 = vpop.f32.mrb[0].mxu0
        %v1584 = vadd.f32 0.0, %v1583
        %v1585 = vpop.f32.mrb[0].mxu0
        %v1586 = vadd.f32 0.0, %v1585
        %v1587 = vpop.f32.mrb[0].mxu0
        %v1588 = vadd.f32 0.0, %v1587
        %v1589 = vpop.f32.mrb[0].mxu0
        %v1590 = vadd.f32 0.0, %v1589
        %1591 = vmatprep.mubr.bf16.mxu0 %v852
        %1592 = vmatmul.mubr.bf16.gmra.mrb[0].mxu0 %v851
        %v1593 = vpop.f32.mrb[0].mxu0
        %v1594 = vadd.f32 0.0, %v1593
        %v1595 = vpop.f32.mrb[0].mxu0
        %v1596 = vadd.f32 0.0, %v1595
        %v1597 = vpop.f32.mrb[0].mxu0
        %v1598 = vadd.f32 0.0, %v1597
        %v1599 = vpop.f32.mrb[0].mxu0
        %v1600 = vadd.f32 0.0, %v1599
        %1601 = vmatprep.mubr.bf16.mxu0 %v858
        %1602 = vmatmul.mubr.bf16.gmra.mrb[0].mxu0 %v857
        %v1603 = vpop.f32.mrb[0].mxu0
        %v1604 = vadd.f32 0.0, %v1603
        %v1605 = vpop.f32.mrb[0].mxu0
        %v1606 = vadd.f32 0.0, %v1605
        %v1607 = vpop.f32.mrb[0].mxu0
        %v1608 = vadd.f32 0.0, %v1607
        %v1609 = vpop.f32.mrb[0].mxu0
        %v1610 = vadd.f32 0.0, %v1609
        %1611 = vmatprep.mubr.bf16.mxu0 %v864
        %1612 = vmatmul.mubr.bf16.gmra.mrb[0].mxu0 %v863
        %v1613 = vpop.f32.mrb[0].mxu0
        %v1614 = vadd.f32 0.0, %v1613
        %v1615 = vpop.f32.mrb[0].mxu0
        %v1616 = vadd.f32 0.0, %v1615
        %v1617 = vpop.f32.mrb[0].mxu0
        %v1618 = vadd.f32 0.0, %v1617
        %v1619 = vpop.f32.mrb[0].mxu0
        %v1620 = vadd.f32 0.0, %v1619
        %1621 = vmatprep.mubr.bf16.mxu0 %v870
        %1622 = vmatmul.mubr.bf16.gmra.mrb[0].mxu0 %v869
        %v1623 = vpop.f32.mrb[0].mxu0
        %v1624 = vadd.f32 0.0, %v1623
        %v1625 = vpop.f32.mrb[0].mxu0
        %v1626 = vadd.f32 0.0, %v1625
        %v1627 = vpop.f32.mrb[0].mxu0
        %v1628 = vadd.f32 0.0, %v1627
        %v1629 = vpop.f32.mrb[0].mxu0
        %v1630 = vadd.f32 0.0, %v1629
        %1631 = vmatprep.mubr.bf16.mxu0 %v876
        %1632 = vmatmul.mubr.bf16.gmra.mrb[0].mxu0 %v875
        %v1633 = vpop.f32.mrb[0].mxu0
        %v1634 = vadd.f32 0.0, %v1633
        %v1635 = vpop.f32.mrb[0].mxu0
        %v1636 = vadd.f32 0.0, %v1635
        %v1637 = vpop.f32.mrb[0].mxu0
        %v1638 = vadd.f32 0.0, %v1637
        %v1639 = vpop.f32.mrb[0].mxu0
        %v1640 = vadd.f32 0.0, %v1639
        %1641 = vmatprep.mubr.bf16.mxu0 %v882
        %1642 = vmatmul.mubr.bf16.gmra.mrb[0].mxu0 %v881
        %v1643 = vpop.f32.mrb[0].mxu0
        %v1644 = vadd.f32 0.0, %v1643
        %v1645 = vpop.f32.mrb[0].mxu0
        %v1646 = vadd.f32 0.0, %v1645
        %v1647 = vpop.f32.mrb[0].mxu0
        %v1648 = vadd.f32 0.0, %v1647
        %v1649 = vpop.f32.mrb[0].mxu0
        %v1650 = vadd.f32 0.0, %v1649
        %1651 = vmatprep.mubr.bf16.mxu0 %v888
        %1652 = vmatmul.mubr.bf16.gmra.mrb[0].mxu0 %v887
        %v1653 = vpop.f32.mrb[0].mxu0
        %v1654 = vadd.f32 0.0, %v1653
        %v1655 = vpop.f32.mrb[0].mxu0
        %v1656 = vadd.f32 0.0, %v1655
        %v1657 = vpop.f32.mrb[0].mxu0
        %v1658 = vadd.f32 0.0, %v1657
        %v1659 = vpop.f32.mrb[0].mxu0
        %v1660 = vadd.f32 0.0, %v1659
        %1661 = vdwg.mxu0
        %1662 = vmatprep.subr.bf16.mxu0 %v1280
        %1663 = vmatpush1.bf16.xpose.msra.mxu0 %v1279
        %1664 = vmatprep.subr.bf16.mxu0 %v1286
        %1665 = vmatpush1.bf16.xpose.msra.mxu0 %v1285
        %1666 = vmatprep.subr.bf16.mxu0 %v1292
        %1667 = vmatpush1.bf16.xpose.msra.mxu0 %v1291
        %1668 = vmatprep.subr.bf16.mxu0 %v1298
        %1669 = vmatpush1.bf16.xpose.msra.mxu0 %v1297
        %1670 = vmatprep.subr.bf16.mxu0 %v1304
        %1671 = vmatpush1.bf16.xpose.msra.mxu0 %v1303
        %1672 = vmatprep.subr.bf16.mxu0 %v1310
        %1673 = vmatpush1.bf16.xpose.msra.mxu0 %v1309
        %1674 = vmatprep.subr.bf16.mxu0 %v1316
        %1675 = vmatpush1.bf16.xpose.msra.mxu0 %v1315
        %1676 = vmatprep.subr.bf16.mxu0 %v1322
        %1677 = vmatpush1.bf16.xpose.msra.mxu0 %v1321
        %1678 = vmatprep.subr.bf16.mxu0 %v1328
        %1679 = vmatpush1.bf16.xpose.msra.mxu0 %v1327
        %1680 = vmatprep.subr.bf16.mxu0 %v1334
        %1681 = vmatpush1.bf16.xpose.msra.mxu0 %v1333
        %1682 = vmatprep.subr.bf16.mxu0 %v1340
        %1683 = vmatpush1.bf16.xpose.msra.mxu0 %v1339
        %1684 = vmatprep.subr.bf16.mxu0 %v1346
        %1685 = vmatpush1.bf16.xpose.msra.mxu0 %v1345
        %1686 = vmatprep.subr.bf16.mxu0 %v1352
        %1687 = vmatpush1.bf16.xpose.msra.mxu0 %v1351
        %1688 = vmatprep.subr.bf16.mxu0 %v1358
        %1689 = vmatpush1.bf16.xpose.msra.mxu0 %v1357
        %1690 = vmatprep.subr.bf16.mxu0 %v1364
        %1691 = vmatpush1.bf16.xpose.msra.mxu0 %v1363
        %1692 = vmatprep.subr.bf16.mxu0 %v1370
        %1693 = vmatpush1.bf16.xpose.msra.mxu0 %v1369
        %1694 = vmatprep.mubr.bf16.mxu0 %v800
        %1695 = vmatmul.mubr.bf16.gmra.mrb[0].mxu0 %v799
        %v1696 = vpop.f32.mrb[0].mxu0
        %v1697 = vadd.f32 %v1504, %v1696
        %v1698 = vpop.f32.mrb[0].mxu0
        %v1699 = vadd.f32 %v1506, %v1698
        %v1700 = vpop.f32.mrb[0].mxu0
        %v1701 = vadd.f32 %v1508, %v1700
        %v1702 = vpop.f32.mrb[0].mxu0
        %v1703 = vadd.f32 %v1510, %v1702
        %1704 = vmatprep.mubr.bf16.mxu0 %v806
        %1705 = vmatmul.mubr.bf16.gmra.mrb[0].mxu0 %v805
        %v1706 = vpop.f32.mrb[0].mxu0
        %v1707 = vadd.f32 %v1514, %v1706
        %v1708 = vpop.f32.mrb[0].mxu0
        %v1709 = vadd.f32 %v1516, %v1708
        %v1710 = vpop.f32.mrb[0].mxu0
        %v1711 = vadd.f32 %v1518, %v1710
        %v1712 = vpop.f32.mrb[0].mxu0
        %v1713 = vadd.f32 %v1520, %v1712
        %1714 = vmatprep.mubr.bf16.mxu0 %v812
        %1715 = vmatmul.mubr.bf16.gmra.mrb[0].mxu0 %v811
        %v1716 = vpop.f32.mrb[0].mxu0
        %v1717 = vadd.f32 %v1524, %v1716
        %v1718 = vpop.f32.mrb[0].mxu0
        %v1719 = vadd.f32 %v1526, %v1718
        %v1720 = vpop.f32.mrb[0].mxu0
        %v1721 = vadd.f32 %v1528, %v1720
        %v1722 = vpop.f32.mrb[0].mxu0
        %v1723 = vadd.f32 %v1530, %v1722
        %1724 = vmatprep.mubr.bf16.mxu0 %v818
        %1725 = vmatmul.mubr.bf16.gmra.mrb[0].mxu0 %v817
        %v1726 = vpop.f32.mrb[0].mxu0
        %v1727 = vadd.f32 %v1534, %v1726
        %v1728 = vpop.f32.mrb[0].mxu0
        %v1729 = vadd.f32 %v1536, %v1728
        %v1730 = vpop.f32.mrb[0].mxu0
        %v1731 = vadd.f32 %v1538, %v1730
        %v1732 = vpop.f32.mrb[0].mxu0
        %v1733 = vadd.f32 %v1540, %v1732
        %1734 = vmatprep.mubr.bf16.mxu0 %v824
        %1735 = vmatmul.mubr.bf16.gmra.mrb[0].mxu0 %v823
        %v1736 = vpop.f32.mrb[0].mxu0
        %v1737 = vadd.f32 %v1544, %v1736
        %v1738 = vpop.f32.mrb[0].mxu0
        %v1739 = vadd.f32 %v1546, %v1738
        %v1740 = vpop.f32.mrb[0].mxu0
        %v1741 = vadd.f32 %v1548, %v1740
        %v1742 = vpop.f32.mrb[0].mxu0
        %v1743 = vadd.f32 %v1550, %v1742
        %1744 = vmatprep.mubr.bf16.mxu0 %v830
        %1745 = vmatmul.mubr.bf16.gmra.mrb[0].mxu0 %v829
        %v1746 = vpop.f32.mrb[0].mxu0
        %v1747 = vadd.f32 %v1554, %v1746
        %v1748 = vpop.f32.mrb[0].mxu0
        %v1749 = vadd.f32 %v1556, %v1748
        %v1750 = vpop.f32.mrb[0].mxu0
        %v1751 = vadd.f32 %v1558, %v1750
        %v1752 = vpop.f32.mrb[0].mxu0
        %v1753 = vadd.f32 %v1560, %v1752
        %1754 = vmatprep.mubr.bf16.mxu0 %v836
        %1755 = vmatmul.mubr.bf16.gmra.mrb[0].mxu0 %v835
        %v1756 = vpop.f32.mrb[0].mxu0
        %v1757 = vadd.f32 %v1564, %v1756
        %v1758 = vpop.f32.mrb[0].mxu0
        %v1759 = vadd.f32 %v1566, %v1758
        %v1760 = vpop.f32.mrb[0].mxu0
        %v1761 = vadd.f32 %v1568, %v1760
        %v1762 = vpop.f32.mrb[0].mxu0
        %v1763 = vadd.f32 %v1570, %v1762
        %1764 = vmatprep.mubr.bf16.mxu0 %v842
        %1765 = vmatmul.mubr.bf16.gmra.mrb[0].mxu0 %v841
        %v1766 = vpop.f32.mrb[0].mxu0
        %v1767 = vadd.f32 %v1574, %v1766
        %v1768 = vpop.f32.mrb[0].mxu0
        %v1769 = vadd.f32 %v1576, %v1768
        %v1770 = vpop.f32.mrb[0].mxu0
        %v1771 = vadd.f32 %v1578, %v1770
        %v1772 = vpop.f32.mrb[0].mxu0
        %v1773 = vadd.f32 %v1580, %v1772
        %1774 = vmatprep.mubr.bf16.mxu0 %v848
        %1775 = vmatmul.mubr.bf16.gmra.mrb[0].mxu0 %v847
        %v1776 = vpop.f32.mrb[0].mxu0
        %v1777 = vadd.f32 %v1584, %v1776
        %v1778 = vpop.f32.mrb[0].mxu0
        %v1779 = vadd.f32 %v1586, %v1778
        %v1780 = vpop.f32.mrb[0].mxu0
        %v1781 = vadd.f32 %v1588, %v1780
        %v1782 = vpop.f32.mrb[0].mxu0
        %v1783 = vadd.f32 %v1590, %v1782
        %1784 = vmatprep.mubr.bf16.mxu0 %v854
        %1785 = vmatmul.mubr.bf16.gmra.mrb[0].mxu0 %v853
        %v1786 = vpop.f32.mrb[0].mxu0
        %v1787 = vadd.f32 %v1594, %v1786
        %v1788 = vpop.f32.mrb[0].mxu0
        %v1789 = vadd.f32 %v1596, %v1788
        %v1790 = vpop.f32.mrb[0].mxu0
        %v1791 = vadd.f32 %v1598, %v1790
        %v1792 = vpop.f32.mrb[0].mxu0
        %v1793 = vadd.f32 %v1600, %v1792
        %1794 = vmatprep.mubr.bf16.mxu0 %v860
        %1795 = vmatmul.mubr.bf16.gmra.mrb[0].mxu0 %v859
        %v1796 = vpop.f32.mrb[0].mxu0
        %v1797 = vadd.f32 %v1604, %v1796
        %v1798 = vpop.f32.mrb[0].mxu0
        %v1799 = vadd.f32 %v1606, %v1798
        %v1800 = vpop.f32.mrb[0].mxu0
        %v1801 = vadd.f32 %v1608, %v1800
        %v1802 = vpop.f32.mrb[0].mxu0
        %v1803 = vadd.f32 %v1610, %v1802
        %1804 = vmatprep.mubr.bf16.mxu0 %v866
        %1805 = vmatmul.mubr.bf16.gmra.mrb[0].mxu0 %v865
        %v1806 = vpop.f32.mrb[0].mxu0
        %v1807 = vadd.f32 %v1614, %v1806
        %v1808 = vpop.f32.mrb[0].mxu0
        %v1809 = vadd.f32 %v1616, %v1808
        %v1810 = vpop.f32.mrb[0].mxu0
        %v1811 = vadd.f32 %v1618, %v1810
        %v1812 = vpop.f32.mrb[0].mxu0
        %v1813 = vadd.f32 %v1620, %v1812
        %1814 = vmatprep.mubr.bf16.mxu0 %v872
        %1815 = vmatmul.mubr.bf16.gmra.mrb[0].mxu0 %v871
        %v1816 = vpop.f32.mrb[0].mxu0
        %v1817 = vadd.f32 %v1624, %v1816
        %v1818 = vpop.f32.mrb[0].mxu0
        %v1819 = vadd.f32 %v1626, %v1818
        %v1820 = vpop.f32.mrb[0].mxu0
        %v1821 = vadd.f32 %v1628, %v1820
        %v1822 = vpop.f32.mrb[0].mxu0
        %v1823 = vadd.f32 %v1630, %v1822
        %1824 = vmatprep.mubr.bf16.mxu0 %v878
        %1825 = vmatmul.mubr.bf16.gmra.mrb[0].mxu0 %v877
        %v1826 = vpop.f32.mrb[0].mxu0
        %v1827 = vadd.f32 %v1634, %v1826
        %v1828 = vpop.f32.mrb[0].mxu0
        %v1829 = vadd.f32 %v1636, %v1828
        %v1830 = vpop.f32.mrb[0].mxu0
        %v1831 = vadd.f32 %v1638, %v1830
        %v1832 = vpop.f32.mrb[0].mxu0
        %v1833 = vadd.f32 %v1640, %v1832
        %1834 = vmatprep.mubr.bf16.mxu0 %v884
        %1835 = vmatmul.mubr.bf16.gmra.mrb[0].mxu0 %v883
        %v1836 = vpop.f32.mrb[0].mxu0
        %v1837 = vadd.f32 %v1644, %v1836
        %v1838 = vpop.f32.mrb[0].mxu0
        %v1839 = vadd.f32 %v1646, %v1838
        %v1840 = vpop.f32.mrb[0].mxu0
        %v1841 = vadd.f32 %v1648, %v1840
        %v1842 = vpop.f32.mrb[0].mxu0
        %v1843 = vadd.f32 %v1650, %v1842
        %1844 = vmatprep.mubr.bf16.mxu0 %v890
        %1845 = vmatmul.mubr.bf16.gmra.mrb[0].mxu0 %v889
        %v1846 = vpop.f32.mrb[0].mxu0
        %v1847 = vadd.f32 %v1654, %v1846
        %v1848 = vpop.f32.mrb[0].mxu0
        %v1849 = vadd.f32 %v1656, %v1848
        %v1850 = vpop.f32.mrb[0].mxu0
        %v1851 = vadd.f32 %v1658, %v1850
        %v1852 = vpop.f32.mrb[0].mxu0
        %v1853 = vadd.f32 %v1660, %v1852
        %1854 = vdwg.mxu0
        %1855 = vmatprep.subr.bf16.mxu0 %v1282
        %1856 = vmatpush1.bf16.xpose.msra.mxu0 %v1281
        %1857 = vmatprep.subr.bf16.mxu0 %v1288
        %1858 = vmatpush1.bf16.xpose.msra.mxu0 %v1287
        %1859 = vmatprep.subr.bf16.mxu0 %v1294
        %1860 = vmatpush1.bf16.xpose.msra.mxu0 %v1293
        %1861 = vmatprep.subr.bf16.mxu0 %v1300
        %1862 = vmatpush1.bf16.xpose.msra.mxu0 %v1299
        %1863 = vmatprep.subr.bf16.mxu0 %v1306
        %1864 = vmatpush1.bf16.xpose.msra.mxu0 %v1305
        %1865 = vmatprep.subr.bf16.mxu0 %v1312
        %1866 = vmatpush1.bf16.xpose.msra.mxu0 %v1311
        %1867 = vmatprep.subr.bf16.mxu0 %v1318
        %1868 = vmatpush1.bf16.xpose.msra.mxu0 %v1317
        %1869 = vmatprep.subr.bf16.mxu0 %v1324
        %1870 = vmatpush1.bf16.xpose.msra.mxu0 %v1323
        %1871 = vmatprep.subr.bf16.mxu0 %v1330
        %1872 = vmatpush1.bf16.xpose.msra.mxu0 %v1329
        %1873 = vmatprep.subr.bf16.mxu0 %v1336
        %1874 = vmatpush1.bf16.xpose.msra.mxu0 %v1335
        %1875 = vmatprep.subr.bf16.mxu0 %v1342
        %1876 = vmatpush1.bf16.xpose.msra.mxu0 %v1341
        %1877 = vmatprep.subr.bf16.mxu0 %v1348
        %1878 = vmatpush1.bf16.xpose.msra.mxu0 %v1347
        %1879 = vmatprep.subr.bf16.mxu0 %v1354
        %1880 = vmatpush1.bf16.xpose.msra.mxu0 %v1353
        %1881 = vmatprep.subr.bf16.mxu0 %v1360
        %1882 = vmatpush1.bf16.xpose.msra.mxu0 %v1359
        %1883 = vmatprep.subr.bf16.mxu0 %v1366
        %1884 = vmatpush1.bf16.xpose.msra.mxu0 %v1365
        %1885 = vmatprep.subr.bf16.mxu0 %v1372
        %1886 = vmatpush1.bf16.xpose.msra.mxu0 %v1371
        %1887 = vmatprep.mubr.bf16.mxu0 %v802
        %1888 = vmatmul.mubr.bf16.gmra.mrb[0].mxu0 %v801
        %v1889 = vpop.f32.mrb[0].mxu0
        %v1890 = vadd.f32 %v1697, %v1889
        %v1891 = vpop.f32.mrb[0].mxu0
        %v1892 = vadd.f32 %v1699, %v1891
        %v1893 = vpop.f32.mrb[0].mxu0
        %v1894 = vadd.f32 %v1701, %v1893
        %v1895 = vpop.f32.mrb[0].mxu0
        %v1896 = vadd.f32 %v1703, %v1895
        %1897 = vmatprep.mubr.bf16.mxu0 %v808
        %1898 = vmatmul.mubr.bf16.gmra.mrb[0].mxu0 %v807
        %v1899 = vpop.f32.mrb[0].mxu0
        %v1900 = vadd.f32 %v1707, %v1899
        %v1901 = vpop.f32.mrb[0].mxu0
        %v1902 = vadd.f32 %v1709, %v1901
        %v1903 = vpop.f32.mrb[0].mxu0
        %v1904 = vadd.f32 %v1711, %v1903
        %v1905 = vpop.f32.mrb[0].mxu0
        %v1906 = vadd.f32 %v1713, %v1905
        %1907 = vmatprep.mubr.bf16.mxu0 %v814
        %1908 = vmatmul.mubr.bf16.gmra.mrb[0].mxu0 %v813
        %v1909 = vpop.f32.mrb[0].mxu0
        %v1910 = vadd.f32 %v1717, %v1909
        %v1911 = vpop.f32.mrb[0].mxu0
        %v1912 = vadd.f32 %v1719, %v1911
        %v1913 = vpop.f32.mrb[0].mxu0
        %v1914 = vadd.f32 %v1721, %v1913
        %v1915 = vpop.f32.mrb[0].mxu0
        %v1916 = vadd.f32 %v1723, %v1915
        %1917 = vmatprep.mubr.bf16.mxu0 %v820
        %1918 = vmatmul.mubr.bf16.gmra.mrb[0].mxu0 %v819
        %v1919 = vpop.f32.mrb[0].mxu0
        %v1920 = vadd.f32 %v1727, %v1919
        %v1921 = vpop.f32.mrb[0].mxu0
        %v1922 = vadd.f32 %v1729, %v1921
        %v1923 = vpop.f32.mrb[0].mxu0
        %v1924 = vadd.f32 %v1731, %v1923
        %v1925 = vpop.f32.mrb[0].mxu0
        %v1926 = vadd.f32 %v1733, %v1925
        %1927 = vmatprep.mubr.bf16.mxu0 %v826
        %1928 = vmatmul.mubr.bf16.gmra.mrb[0].mxu0 %v825
        %v1929 = vpop.f32.mrb[0].mxu0
        %v1930 = vadd.f32 %v1737, %v1929
        %v1931 = vpop.f32.mrb[0].mxu0
        %v1932 = vadd.f32 %v1739, %v1931
        %v1933 = vpop.f32.mrb[0].mxu0
        %v1934 = vadd.f32 %v1741, %v1933
        %v1935 = vpop.f32.mrb[0].mxu0
        %v1936 = vadd.f32 %v1743, %v1935
        %1937 = vmatprep.mubr.bf16.mxu0 %v832
        %1938 = vmatmul.mubr.bf16.gmra.mrb[0].mxu0 %v831
        %v1939 = vpop.f32.mrb[0].mxu0
        %v1940 = vadd.f32 %v1747, %v1939
        %v1941 = vpop.f32.mrb[0].mxu0
        %v1942 = vadd.f32 %v1749, %v1941
        %v1943 = vpop.f32.mrb[0].mxu0
        %v1944 = vadd.f32 %v1751, %v1943
        %v1945 = vpop.f32.mrb[0].mxu0
        %v1946 = vadd.f32 %v1753, %v1945
        %1947 = vmatprep.mubr.bf16.mxu0 %v838
        %1948 = vmatmul.mubr.bf16.gmra.mrb[0].mxu0 %v837
        %v1949 = vpop.f32.mrb[0].mxu0
        %v1950 = vadd.f32 %v1757, %v1949
        %v1951 = vpop.f32.mrb[0].mxu0
        %v1952 = vadd.f32 %v1759, %v1951
        %v1953 = vpop.f32.mrb[0].mxu0
        %v1954 = vadd.f32 %v1761, %v1953
        %v1955 = vpop.f32.mrb[0].mxu0
        %v1956 = vadd.f32 %v1763, %v1955
        %1957 = vmatprep.mubr.bf16.mxu0 %v844
        %1958 = vmatmul.mubr.bf16.gmra.mrb[0].mxu0 %v843
        %v1959 = vpop.f32.mrb[0].mxu0
        %v1960 = vadd.f32 %v1767, %v1959
        %v1961 = vpop.f32.mrb[0].mxu0
        %v1962 = vadd.f32 %v1769, %v1961
        %v1963 = vpop.f32.mrb[0].mxu0
        %v1964 = vadd.f32 %v1771, %v1963
        %v1965 = vpop.f32.mrb[0].mxu0
        %v1966 = vadd.f32 %v1773, %v1965
        %1967 = vmatprep.mubr.bf16.mxu0 %v850
        %1968 = vmatmul.mubr.bf16.gmra.mrb[0].mxu0 %v849
        %v1969 = vpop.f32.mrb[0].mxu0
        %v1970 = vadd.f32 %v1777, %v1969
        %v1971 = vpop.f32.mrb[0].mxu0
        %v1972 = vadd.f32 %v1779, %v1971
        %v1973 = vpop.f32.mrb[0].mxu0
        %v1974 = vadd.f32 %v1781, %v1973
        %v1975 = vpop.f32.mrb[0].mxu0
        %v1976 = vadd.f32 %v1783, %v1975
        %1977 = vmatprep.mubr.bf16.mxu0 %v856
        %1978 = vmatmul.mubr.bf16.gmra.mrb[0].mxu0 %v855
        %v1979 = vpop.f32.mrb[0].mxu0
        %v1980 = vadd.f32 %v1787, %v1979
        %v1981 = vpop.f32.mrb[0].mxu0
        %v1982 = vadd.f32 %v1789, %v1981
        %v1983 = vpop.f32.mrb[0].mxu0
        %v1984 = vadd.f32 %v1791, %v1983
        %v1985 = vpop.f32.mrb[0].mxu0
        %v1986 = vadd.f32 %v1793, %v1985
        %1987 = vmatprep.mubr.bf16.mxu0 %v862
        %1988 = vmatmul.mubr.bf16.gmra.mrb[0].mxu0 %v861
        %v1989 = vpop.f32.mrb[0].mxu0
        %v1990 = vadd.f32 %v1797, %v1989
        %v1991 = vpop.f32.mrb[0].mxu0
        %v1992 = vadd.f32 %v1799, %v1991
        %v1993 = vpop.f32.mrb[0].mxu0
        %v1994 = vadd.f32 %v1801, %v1993
        %v1995 = vpop.f32.mrb[0].mxu0
        %v1996 = vadd.f32 %v1803, %v1995
        %1997 = vmatprep.mubr.bf16.mxu0 %v868
        %1998 = vmatmul.mubr.bf16.gmra.mrb[0].mxu0 %v867
        %v1999 = vpop.f32.mrb[0].mxu0
        %v2000 = vadd.f32 %v1807, %v1999
        %v2001 = vpop.f32.mrb[0].mxu0
        %v2002 = vadd.f32 %v1809, %v2001
        %v2003 = vpop.f32.mrb[0].mxu0
        %v2004 = vadd.f32 %v1811, %v2003
        %v2005 = vpop.f32.mrb[0].mxu0
        %v2006 = vadd.f32 %v1813, %v2005
        %2007 = vmatprep.mubr.bf16.mxu0 %v874
        %2008 = vmatmul.mubr.bf16.gmra.mrb[0].mxu0 %v873
        %v2009 = vpop.f32.mrb[0].mxu0
        %v2010 = vadd.f32 %v1817, %v2009
        %v2011 = vpop.f32.mrb[0].mxu0
        %v2012 = vadd.f32 %v1819, %v2011
        %v2013 = vpop.f32.mrb[0].mxu0
        %v2014 = vadd.f32 %v1821, %v2013
        %v2015 = vpop.f32.mrb[0].mxu0
        %v2016 = vadd.f32 %v1823, %v2015
        %2017 = vmatprep.mubr.bf16.mxu0 %v880
        %2018 = vmatmul.mubr.bf16.gmra.mrb[0].mxu0 %v879
        %v2019 = vpop.f32.mrb[0].mxu0
        %v2020 = vadd.f32 %v1827, %v2019
        %v2021 = vpop.f32.mrb[0].mxu0
        %v2022 = vadd.f32 %v1829, %v2021
        %v2023 = vpop.f32.mrb[0].mxu0
        %v2024 = vadd.f32 %v1831, %v2023
        %v2025 = vpop.f32.mrb[0].mxu0
        %v2026 = vadd.f32 %v1833, %v2025
        %2027 = vmatprep.mubr.bf16.mxu0 %v886
        %2028 = vmatmul.mubr.bf16.gmra.mrb[0].mxu0 %v885
        %v2029 = vpop.f32.mrb[0].mxu0
        %v2030 = vadd.f32 %v1837, %v2029
        %v2031 = vpop.f32.mrb[0].mxu0
        %v2032 = vadd.f32 %v1839, %v2031
        %v2033 = vpop.f32.mrb[0].mxu0
        %v2034 = vadd.f32 %v1841, %v2033
        %v2035 = vpop.f32.mrb[0].mxu0
        %v2036 = vadd.f32 %v1843, %v2035
        %2037 = vmatprep.mubr.bf16.mxu0 %v892
        %2038 = vmatmul.mubr.bf16.gmra.mrb[0].mxu0 %v891
        %v2039 = vpop.f32.mrb[0].mxu0
        %v2040 = vadd.f32 %v1847, %v2039
        %v2041 = vpop.f32.mrb[0].mxu0
        %v2042 = vadd.f32 %v1849, %v2041
        %v2043 = vpop.f32.mrb[0].mxu0
        %v2044 = vadd.f32 %v1851, %v2043
        %v2045 = vpop.f32.mrb[0].mxu0
        %v2046 = vadd.f32 %v1853, %v2045
        %2047 = vdwg.mxu0
        %v2048 = vld [vmem:[%s308] sm:$0xff]
        %v2049 = vld [vmem:[%s308 + $0x8] sm:$0xff]
        %v2050 = vld [vmem:[%s308 + $0x10] sm:$0xff]
        %v2051 = vld [vmem:[%s308 + $0x18] sm:$0xff]
        %v2052 = vld [vmem:[%s308 + $0x20] sm:$0xff]
        %v2053 = vld [vmem:[%s308 + $0x28] sm:$0xff]
        %v2054 = vld [vmem:[%s308 + $0x30] sm:$0xff]
        %v2055 = vld [vmem:[%s308 + $0x38] sm:$0xff]
        %v2056 = vld [vmem:[%s308 + $0x40] sm:$0xff]
        %v2057 = vld [vmem:[%s308 + $0x48] sm:$0xff]
        %v2058 = vld [vmem:[%s308 + $0x50] sm:$0xff]
        %v2059 = vld [vmem:[%s308 + $0x58] sm:$0xff]
        %v2060 = vld [vmem:[%s308 + $0x60] sm:$0xff]
        %v2061 = vld [vmem:[%s308 + $0x68] sm:$0xff]
        %v2062 = vld [vmem:[%s308 + $0x70] sm:$0xff]
        %v2063 = vld [vmem:[%s308 + $0x78] sm:$0xff]
        %v2064 = vld [vmem:[%s308 + $0x80] sm:$0xff]
        %v2065 = vld [vmem:[%s308 + $0x88] sm:$0xff]
        %v2066 = vld [vmem:[%s308 + $0x90] sm:$0xff]
        %v2067 = vld [vmem:[%s308 + $0x98] sm:$0xff]
        %v2068 = vld [vmem:[%s308 + $0xa0] sm:$0xff]
        %v2069 = vld [vmem:[%s308 + $0xa8] sm:$0xff]
        %v2070 = vld [vmem:[%s308 + $0xb0] sm:$0xff]
        %v2071 = vld [vmem:[%s308 + $0xb8] sm:$0xff]
        %v2072 = vld [vmem:[%s308 + $0xc0] sm:$0xff]
        %v2073 = vld [vmem:[%s308 + $0xc8] sm:$0xff]
        %v2074 = vld [vmem:[%s308 + $0xd0] sm:$0xff]
        %v2075 = vld [vmem:[%s308 + $0xd8] sm:$0xff]
        %v2076 = vld [vmem:[%s308 + $0xe0] sm:$0xff]
        %v2077 = vld [vmem:[%s308 + $0xe8] sm:$0xff]
        %v2078 = vld [vmem:[%s308 + $0xf0] sm:$0xff]
        %v2079 = vld [vmem:[%s308 + $0xf8] sm:$0xff]
        %2081 = vset.pattern.permute.xlu0 0
        %2082 = vperm.xlu0 %2081, %v2048
        %v2083 = vpop.permute.xlu0 %2082
        %2086 = vset.pattern.permute.xlu0 0
        %2087 = vperm.xlu0 %2086, %v2049
        %v2088 = vpop.permute.xlu0 %2087
        %2091 = vset.pattern.permute.xlu0 0
        %2092 = vperm.xlu0 %2091, %v2050
        %v2093 = vpop.permute.xlu0 %2092
        %2096 = vset.pattern.permute.xlu0 0
        %2097 = vperm.xlu0 %2096, %v2051
        %v2098 = vpop.permute.xlu0 %2097
        %2101 = vset.pattern.permute.xlu0 0
        %2102 = vperm.xlu0 %2101, %v2052
        %v2103 = vpop.permute.xlu0 %2102
        %2106 = vset.pattern.permute.xlu0 0
        %2107 = vperm.xlu0 %2106, %v2053
        %v2108 = vpop.permute.xlu0 %2107
        %2111 = vset.pattern.permute.xlu0 0
        %2112 = vperm.xlu0 %2111, %v2054
        %v2113 = vpop.permute.xlu0 %2112
        %2116 = vset.pattern.permute.xlu0 0
        %2117 = vperm.xlu0 %2116, %v2055
        %v2118 = vpop.permute.xlu0 %2117
        %2121 = vset.pattern.permute.xlu0 0
        %2122 = vperm.xlu0 %2121, %v2056
        %v2123 = vpop.permute.xlu0 %2122
        %2126 = vset.pattern.permute.xlu0 0
        %2127 = vperm.xlu0 %2126, %v2057
        %v2128 = vpop.permute.xlu0 %2127
        %2131 = vset.pattern.permute.xlu0 0
        %2132 = vperm.xlu0 %2131, %v2058
        %v2133 = vpop.permute.xlu0 %2132
        %2136 = vset.pattern.permute.xlu0 0
        %2137 = vperm.xlu0 %2136, %v2059
        %v2138 = vpop.permute.xlu0 %2137
        %2141 = vset.pattern.permute.xlu0 0
        %2142 = vperm.xlu0 %2141, %v2060
        %v2143 = vpop.permute.xlu0 %2142
        %2146 = vset.pattern.permute.xlu0 0
        %2147 = vperm.xlu0 %2146, %v2061
        %v2148 = vpop.permute.xlu0 %2147
        %2151 = vset.pattern.permute.xlu0 0
        %2152 = vperm.xlu0 %2151, %v2062
        %v2153 = vpop.permute.xlu0 %2152
        %2156 = vset.pattern.permute.xlu0 0
        %2157 = vperm.xlu0 %2156, %v2063
        %v2158 = vpop.permute.xlu0 %2157
        %2161 = vset.pattern.permute.xlu0 0
        %2162 = vperm.xlu0 %2161, %v2064
        %v2163 = vpop.permute.xlu0 %2162
        %2166 = vset.pattern.permute.xlu0 0
        %2167 = vperm.xlu0 %2166, %v2065
        %v2168 = vpop.permute.xlu0 %2167
        %2171 = vset.pattern.permute.xlu0 0
        %2172 = vperm.xlu0 %2171, %v2066
        %v2173 = vpop.permute.xlu0 %2172
        %2176 = vset.pattern.permute.xlu0 0
        %2177 = vperm.xlu0 %2176, %v2067
        %v2178 = vpop.permute.xlu0 %2177
        %2181 = vset.pattern.permute.xlu0 0
        %2182 = vperm.xlu0 %2181, %v2068
        %v2183 = vpop.permute.xlu0 %2182
        %2186 = vset.pattern.permute.xlu0 0
        %2187 = vperm.xlu0 %2186, %v2069
        %v2188 = vpop.permute.xlu0 %2187
        %2191 = vset.pattern.permute.xlu0 0
        %2192 = vperm.xlu0 %2191, %v2070
        %v2193 = vpop.permute.xlu0 %2192
        %2196 = vset.pattern.permute.xlu0 0
        %2197 = vperm.xlu0 %2196, %v2071
        %v2198 = vpop.permute.xlu0 %2197
        %2201 = vset.pattern.permute.xlu0 0
        %2202 = vperm.xlu0 %2201, %v2072
        %v2203 = vpop.permute.xlu0 %2202
        %2206 = vset.pattern.permute.xlu0 0
        %2207 = vperm.xlu0 %2206, %v2073
        %v2208 = vpop.permute.xlu0 %2207
        %2211 = vset.pattern.permute.xlu0 0
        %2212 = vperm.xlu0 %2211, %v2074
        %v2213 = vpop.permute.xlu0 %2212
        %2216 = vset.pattern.permute.xlu0 0
        %2217 = vperm.xlu0 %2216, %v2075
        %v2218 = vpop.permute.xlu0 %2217
        %2221 = vset.pattern.permute.xlu0 0
        %2222 = vperm.xlu0 %2221, %v2076
        %v2223 = vpop.permute.xlu0 %2222
        %2226 = vset.pattern.permute.xlu0 0
        %2227 = vperm.xlu0 %2226, %v2077
        %v2228 = vpop.permute.xlu0 %2227
        %2231 = vset.pattern.permute.xlu0 0
        %2232 = vperm.xlu0 %2231, %v2078
        %v2233 = vpop.permute.xlu0 %2232
        %2236 = vset.pattern.permute.xlu0 0
        %2237 = vperm.xlu0 %2236, %v2079
        %v2238 = vpop.permute.xlu0 %2237
        %v2240 = vmul.f32 %v1890, %v2083
        %v2241 = vmul.f32 %v1892, %v2083
        %v2242 = vmul.f32 %v1894, %v2088
        %v2243 = vmul.f32 %v1896, %v2088
        %v2244 = vmul.f32 %v1900, %v2093
        %v2245 = vmul.f32 %v1902, %v2093
        %v2246 = vmul.f32 %v1904, %v2098
        %v2247 = vmul.f32 %v1906, %v2098
        %v2248 = vmul.f32 %v1910, %v2103
        %v2249 = vmul.f32 %v1912, %v2103
        %v2250 = vmul.f32 %v1914, %v2108
        %v2251 = vmul.f32 %v1916, %v2108
        %v2252 = vmul.f32 %v1920, %v2113
        %v2253 = vmul.f32 %v1922, %v2113
        %v2254 = vmul.f32 %v1924, %v2118
        %v2255 = vmul.f32 %v1926, %v2118
        %v2256 = vmul.f32 %v1930, %v2123
        %v2257 = vmul.f32 %v1932, %v2123
        %v2258 = vmul.f32 %v1934, %v2128
        %v2259 = vmul.f32 %v1936, %v2128
        %v2260 = vmul.f32 %v1940, %v2133
        %v2261 = vmul.f32 %v1942, %v2133
        %v2262 = vmul.f32 %v1944, %v2138
        %v2263 = vmul.f32 %v1946, %v2138
        %v2264 = vmul.f32 %v1950, %v2143
        %v2265 = vmul.f32 %v1952, %v2143
        %v2266 = vmul.f32 %v1954, %v2148
        %v2267 = vmul.f32 %v1956, %v2148
        %v2268 = vmul.f32 %v1960, %v2153
        %v2269 = vmul.f32 %v1962, %v2153
        %v2270 = vmul.f32 %v1964, %v2158
        %v2271 = vmul.f32 %v1966, %v2158
        %v2272 = vmul.f32 %v1970, %v2163
        %v2273 = vmul.f32 %v1972, %v2163
        %v2274 = vmul.f32 %v1974, %v2168
        %v2275 = vmul.f32 %v1976, %v2168
        %v2276 = vmul.f32 %v1980, %v2173
        %v2277 = vmul.f32 %v1982, %v2173
        %v2278 = vmul.f32 %v1984, %v2178
        %v2279 = vmul.f32 %v1986, %v2178
        %v2280 = vmul.f32 %v1990, %v2183
        %v2281 = vmul.f32 %v1992, %v2183
        %v2282 = vmul.f32 %v1994, %v2188
        %v2283 = vmul.f32 %v1996, %v2188
        %v2284 = vmul.f32 %v2000, %v2193
        %v2285 = vmul.f32 %v2002, %v2193
        %v2286 = vmul.f32 %v2004, %v2198
        %v2287 = vmul.f32 %v2006, %v2198
        %v2288 = vmul.f32 %v2010, %v2203
        %v2289 = vmul.f32 %v2012, %v2203
        %v2290 = vmul.f32 %v2014, %v2208
        %v2291 = vmul.f32 %v2016, %v2208
        %v2292 = vmul.f32 %v2020, %v2213
        %v2293 = vmul.f32 %v2022, %v2213
        %v2294 = vmul.f32 %v2024, %v2218
        %v2295 = vmul.f32 %v2026, %v2218
        %v2296 = vmul.f32 %v2030, %v2223
        %v2297 = vmul.f32 %v2032, %v2223
        %v2298 = vmul.f32 %v2034, %v2228
        %v2299 = vmul.f32 %v2036, %v2228
        %v2300 = vmul.f32 %v2040, %v2233
        %v2301 = vmul.f32 %v2042, %v2233
        %v2302 = vmul.f32 %v2044, %v2238
        %v2303 = vmul.f32 %v2046, %v2238
        %v2304 = vld [vmem:[%s313] sm:$0x3]
        %v2306 = vlaneseq
        %v2307 = vshrl.u32 %v2306, 7
        %v2308 = vsub.s32 0, %v2307
        %v2309 = vrot.slane %v2304, %v2308
        %v2310 = vlaneseq
        %v2311 = vshrl.u32 %v2310, 7
        %v2312 = vsub.s32 1, %v2311
        %v2313 = vrot.slane %v2304, %v2312
        %v2316 = vmul.f32 %v2240, %v2309
        %v2317 = vmul.f32 %v2241, %v2313
        %v2318 = vmul.f32 %v2242, %v2309
        %v2319 = vmul.f32 %v2243, %v2313
        %v2320 = vmul.f32 %v2244, %v2309
        %v2321 = vmul.f32 %v2245, %v2313
        %v2322 = vmul.f32 %v2246, %v2309
        %v2323 = vmul.f32 %v2247, %v2313
        %v2324 = vmul.f32 %v2248, %v2309
        %v2325 = vmul.f32 %v2249, %v2313
        %v2326 = vmul.f32 %v2250, %v2309
        %v2327 = vmul.f32 %v2251, %v2313
        %v2328 = vmul.f32 %v2252, %v2309
        %v2329 = vmul.f32 %v2253, %v2313
        %v2330 = vmul.f32 %v2254, %v2309
        %v2331 = vmul.f32 %v2255, %v2313
        %v2332 = vmul.f32 %v2256, %v2309
        %v2333 = vmul.f32 %v2257, %v2313
        %v2334 = vmul.f32 %v2258, %v2309
        %v2335 = vmul.f32 %v2259, %v2313
        %v2336 = vmul.f32 %v2260, %v2309
        %v2337 = vmul.f32 %v2261, %v2313
        %v2338 = vmul.f32 %v2262, %v2309
        %v2339 = vmul.f32 %v2263, %v2313
        %v2340 = vmul.f32 %v2264, %v2309
        %v2341 = vmul.f32 %v2265, %v2313
        %v2342 = vmul.f32 %v2266, %v2309
        %v2343 = vmul.f32 %v2267, %v2313
        %v2344 = vmul.f32 %v2268, %v2309
        %v2345 = vmul.f32 %v2269, %v2313
        %v2346 = vmul.f32 %v2270, %v2309
        %v2347 = vmul.f32 %v2271, %v2313
        %v2348 = vmul.f32 %v2272, %v2309
        %v2349 = vmul.f32 %v2273, %v2313
        %v2350 = vmul.f32 %v2274, %v2309
        %v2351 = vmul.f32 %v2275, %v2313
        %v2352 = vmul.f32 %v2276, %v2309
        %v2353 = vmul.f32 %v2277, %v2313
        %v2354 = vmul.f32 %v2278, %v2309
        %v2355 = vmul.f32 %v2279, %v2313
        %v2356 = vmul.f32 %v2280, %v2309
        %v2357 = vmul.f32 %v2281, %v2313
        %v2358 = vmul.f32 %v2282, %v2309
        %v2359 = vmul.f32 %v2283, %v2313
        %v2360 = vmul.f32 %v2284, %v2309
        %v2361 = vmul.f32 %v2285, %v2313
        %v2362 = vmul.f32 %v2286, %v2309
        %v2363 = vmul.f32 %v2287, %v2313
        %v2364 = vmul.f32 %v2288, %v2309
        %v2365 = vmul.f32 %v2289, %v2313
        %v2366 = vmul.f32 %v2290, %v2309
        %v2367 = vmul.f32 %v2291, %v2313
        %v2368 = vmul.f32 %v2292, %v2309
        %v2369 = vmul.f32 %v2293, %v2313
        %v2370 = vmul.f32 %v2294, %v2309
        %v2371 = vmul.f32 %v2295, %v2313
        %v2372 = vmul.f32 %v2296, %v2309
        %v2373 = vmul.f32 %v2297, %v2313
        %v2374 = vmul.f32 %v2298, %v2309
        %v2375 = vmul.f32 %v2299, %v2313
        %v2376 = vmul.f32 %v2300, %v2309
        %v2377 = vmul.f32 %v2301, %v2313
        %v2378 = vmul.f32 %v2302, %v2309
        %v2379 = vmul.f32 %v2303, %v2313
        %2380 = vst [vmem:[%s301] sm:$0xff] %v2316
        %2381 = vst [vmem:[%s301 + $0x8] sm:$0xff] %v2317
        %2382 = vst [vmem:[%s301 + $0x10] sm:$0xff] %v2318
        %2383 = vst [vmem:[%s301 + $0x18] sm:$0xff] %v2319
        %2384 = vst [vmem:[%s301 + $0x20] sm:$0xff] %v2320
        %2385 = vst [vmem:[%s301 + $0x28] sm:$0xff] %v2321
        %2386 = vst [vmem:[%s301 + $0x30] sm:$0xff] %v2322
        %2387 = vst [vmem:[%s301 + $0x38] sm:$0xff] %v2323
        %2388 = vst [vmem:[%s301 + $0x40] sm:$0xff] %v2324
        %2389 = vst [vmem:[%s301 + $0x48] sm:$0xff] %v2325
        %2390 = vst [vmem:[%s301 + $0x50] sm:$0xff] %v2326
        %2391 = vst [vmem:[%s301 + $0x58] sm:$0xff] %v2327
        %2392 = vst [vmem:[%s301 + $0x60] sm:$0xff] %v2328
        %2393 = vst [vmem:[%s301 + $0x68] sm:$0xff] %v2329
        %2394 = vst [vmem:[%s301 + $0x70] sm:$0xff] %v2330
        %2395 = vst [vmem:[%s301 + $0x78] sm:$0xff] %v2331
        %2396 = vst [vmem:[%s301 + $0x80] sm:$0xff] %v2332
        %2397 = vst [vmem:[%s301 + $0x88] sm:$0xff] %v2333
        %2398 = vst [vmem:[%s301 + $0x90] sm:$0xff] %v2334
        %2399 = vst [vmem:[%s301 + $0x98] sm:$0xff] %v2335
        %2400 = vst [vmem:[%s301 + $0xa0] sm:$0xff] %v2336
        %2401 = vst [vmem:[%s301 + $0xa8] sm:$0xff] %v2337
        %2402 = vst [vmem:[%s301 + $0xb0] sm:$0xff] %v2338
        %2403 = vst [vmem:[%s301 + $0xb8] sm:$0xff] %v2339
        %2404 = vst [vmem:[%s301 + $0xc0] sm:$0xff] %v2340
        %2405 = vst [vmem:[%s301 + $0xc8] sm:$0xff] %v2341
        %2406 = vst [vmem:[%s301 + $0xd0] sm:$0xff] %v2342
        %2407 = vst [vmem:[%s301 + $0xd8] sm:$0xff] %v2343
        %2408 = vst [vmem:[%s301 + $0xe0] sm:$0xff] %v2344
        %2409 = vst [vmem:[%s301 + $0xe8] sm:$0xff] %v2345
        %2410 = vst [vmem:[%s301 + $0xf0] sm:$0xff] %v2346
        %2411 = vst [vmem:[%s301 + $0xf8] sm:$0xff] %v2347
        %2412 = vst [vmem:[%s301 + $0x100] sm:$0xff] %v2348
        %2413 = vst [vmem:[%s301 + $0x108] sm:$0xff] %v2349
        %2414 = vst [vmem:[%s301 + $0x110] sm:$0xff] %v2350
        %2415 = vst [vmem:[%s301 + $0x118] sm:$0xff] %v2351
        %2416 = vst [vmem:[%s301 + $0x120] sm:$0xff] %v2352
        %2417 = vst [vmem:[%s301 + $0x128] sm:$0xff] %v2353
        %2418 = vst [vmem:[%s301 + $0x130] sm:$0xff] %v2354
        %2419 = vst [vmem:[%s301 + $0x138] sm:$0xff] %v2355
        %2420 = vst [vmem:[%s301 + $0x140] sm:$0xff] %v2356
        %2421 = vst [vmem:[%s301 + $0x148] sm:$0xff] %v2357
        %2422 = vst [vmem:[%s301 + $0x150] sm:$0xff] %v2358
        %2423 = vst [vmem:[%s301 + $0x158] sm:$0xff] %v2359
        %2424 = vst [vmem:[%s301 + $0x160] sm:$0xff] %v2360
        %2425 = vst [vmem:[%s301 + $0x168] sm:$0xff] %v2361
        %2426 = vst [vmem:[%s301 + $0x170] sm:$0xff] %v2362
        %2427 = vst [vmem:[%s301 + $0x178] sm:$0xff] %v2363
        %2428 = vst [vmem:[%s301 + $0x180] sm:$0xff] %v2364
        %2429 = vst [vmem:[%s301 + $0x188] sm:$0xff] %v2365
        %2430 = vst [vmem:[%s301 + $0x190] sm:$0xff] %v2366
        %2431 = vst [vmem:[%s301 + $0x198] sm:$0xff] %v2367
        %2432 = vst [vmem:[%s301 + $0x1a0] sm:$0xff] %v2368
        %2433 = vst [vmem:[%s301 + $0x1a8] sm:$0xff] %v2369
        %2434 = vst [vmem:[%s301 + $0x1b0] sm:$0xff] %v2370
        %2435 = vst [vmem:[%s301 + $0x1b8] sm:$0xff] %v2371
        %2436 = vst [vmem:[%s301 + $0x1c0] sm:$0xff] %v2372
        %2437 = vst [vmem:[%s301 + $0x1c8] sm:$0xff] %v2373
        %2438 = vst [vmem:[%s301 + $0x1d0] sm:$0xff] %v2374
        %2439 = vst [vmem:[%s301 + $0x1d8] sm:$0xff] %v2375
        %2440 = vst [vmem:[%s301 + $0x1e0] sm:$0xff] %v2376
        %2441 = vst [vmem:[%s301 + $0x1e8] sm:$0xff] %v2377
        %2442 = vst [vmem:[%s301 + $0x1f0] sm:$0xff] %v2378
        %2443 = vst [vmem:[%s301 + $0x1f8] sm:$0xff] %v2379
        %s2444 = sand.u32 %s150, 1
        %s2445 = scalar_lea.sflag [#allocation4], %s2444
        %s2446 = sand.u32 %s150, 1
        %s2447 = smul.addr %s2446, 512
        %s2448 = scalar_lea.vmem [#allocation7], %s2447
        // Predicated region
        $region45: #{tpu_custom_call.1} parent=35 // pred_check
          %p2449 = pneg %p160
        $region46: #{tpu_custom_call.1} parent=35 // pred_check_branch
          %2451 = sbr.rel (%p2449) target = $region48
        $region47: #{tpu_custom_call.1} parent=35 // pred_region
          %s2452 = smul.u32 32, %s28
          %s2453 = smul.u32 2, %s29
          %s2455 = ssub.s32 8192, 8192
          %2456 = vsyncadd %s2445, %s2455
          %s2457 = smul.addr %s2452, 4
          %s2458 = sadd.s32 %s2453, %s2457
          %s2459 = smul.addr %s2458, 128
          %s2460 = scalar_lea.hbm %s4, %s2459
          %s2461 = sshll.u32 %s2448, 4
          %s2462 = int_to_ptr.vmem [resolvable:$true] %s2461
          %2467 = dma.vmem_to_hbm [thread:$0]  %s2462, 8192, %s2460, %s2445, 256, 512, 16
        $region48: #{tpu_custom_call.1} parent=35 // pred_fallthru
          _
      $region36: #{tpu_custom_call.1} parent=5 // pred_fallthru
        _
      %p2468 = scmp.le.s32.totalorder 2, %s19
      // Predicated region
      $region49: #{tpu_custom_call.1} parent=5 // pred_check
        %p2469 = pneg %p2468
      $region50: #{tpu_custom_call.1} parent=5 // pred_check_branch
        %2471 = sbr.rel (%p2469) target = $region52
      $region51: #{tpu_custom_call.1} parent=5 // pred_region
        %s2472 = ssub.s32 %s19, 2
        // Predicated region
        $region53: #{tpu_custom_call.1} parent=51 // pred_check
          %p2473 = pneg %p166
        $region54: #{tpu_custom_call.1} parent=51 // pred_check_branch
          %2475 = sbr.rel (%p2473) target = $region56
        $region55: #{tpu_custom_call.1} parent=51 // pred_region
          %s2476 = sand.u32 %s151, 1
          %s2477 = scalar_lea.sflag [#allocation4], %s2476
          %s2478 = sand.u32 %s151, 1
          %s2479 = smul.addr %s2478, 512
          %s2480 = scalar_lea.vmem [#allocation7], %s2479
          %2481 = dma.done %s2477, 8192
        $region56: #{tpu_custom_call.1} parent=51 // pred_fallthru
          _
      $region52: #{tpu_custom_call.1} parent=5 // pred_fallthru
        _
    $region6: #{tpu_custom_call.1} parent=1 // loop_footer
      %s23 = sadd.s32 1, %s19
    $region7: #{tpu_custom_call.1} parent=1 // loop_footer_branch
      %18 = sbr.rel target = $region3
    $region8: #{tpu_custom_call.1} parent=1 // loop_exit
      _
    %2482 = vsyncpa [#allocation3], 1
    %s2483 = scalar_lea.sflag [#allocation3], 1
    %2484 = vsyncpa %s2483, 1
    %2485 = vsyncpa [#allocation6], 1
    %s2486 = scalar_lea.sflag [#allocation6], 1
    %2487 = vsyncpa %s2486, 1
    %2488 = vsyncpa [#allocation4], 1
    %s2489 = scalar_lea.sflag [#allocation4], 1
    %2490 = vsyncpa %s2489, 1

</llo_original>
